<compile_context>
chip_gen: v7x
topology: tpu7x:2x2x1
jax: 0.10.0
libtpu: 0.0.40
codegen_flags: <defaults>
</compile_context>

<pallas_src>
import math

import jax
import jax.numpy as jnp
import numpy as np
from jax.experimental import pallas as pl
from jax.experimental.pallas import tpu as pltpu


# ---------------------------------------------------------------------------
# Host-side weight packing (all transposes / reorders / dtype casts happen here)
# ---------------------------------------------------------------------------

# Packed gate-column order (each block `hidden` wide):
#   [i_d0, i_d1, f_d0, f_d1, o_d0, o_d1, g_d0, g_d1]
# The sigmoid gates (i, f, o) occupy lanes [0, 6H) and are pre-scaled by 0.5 so the
# kernel uses a single tanh:  sigmoid(x) = 0.5 * tanh(0.5 * x) + 0.5.
# PyTorch gate order in the raw weights is [i, f, g, o].
_GATE_ORDER = ((0, 0.5), (1, 0.5), (3, 0.5), (2, 1.0))


def _pack_cols(t_d0, t_d1, hidden):
    """(rows, 4H) per direction in PyTorch gate order -> (rows, 8H) packed layout."""
    H = hidden
    blocks = []
    for g, scale in _GATE_ORDER:
        blocks.append(t_d0[:, g * H:(g + 1) * H] * scale)
        blocks.append(t_d1[:, g * H:(g + 1) * H] * scale)
    return jnp.concatenate(blocks, axis=1)


def _pack_rec(w_hh_d0, w_hh_d1, hidden):
    """Block-diagonal recurrent weight (2H, 8H); rows ordered [h_d0 | h_d1]."""
    H = hidden
    z = jnp.zeros((H, 4 * H), jnp.float32)
    return _pack_cols(jnp.concatenate([w_hh_d0.T, z], axis=0),
                      jnp.concatenate([z, w_hh_d1.T], axis=0), H)


def _pack_params(params, hidden, num_layers):
    H, L = hidden, num_layers
    w_rec, w_in, biases = [], [], []
    w_l0x = None
    for l in range(L):
        (w_ih_d0, w_hh_d0, b_d0), (w_ih_d1, w_hh_d1, b_d1) = params["lstm"][l]
        wx = _pack_cols(w_ih_d0.T, w_ih_d1.T, H)            # (in_dim or 2H, 8H)
        if l == 0:
            w_l0x = wx
        else:
            w_in.append(wx)
        w_rec.append(_pack_rec(w_hh_d0, w_hh_d1, H))        # (2H, 8H)
        biases.append(_pack_cols(b_d0, b_d1, H))            # (1, 8H), same pre-scale
    packed = {
        "w_l0x": w_l0x.astype(jnp.bfloat16),                # (in_dim, 8H)
        "w_rec": jnp.stack(w_rec).astype(jnp.bfloat16),     # (L, 2H, 8H)
        "b_all": jnp.stack(biases),                         # (L, 1, 8H) f32
        "w_fc": params["w_fc"],                             # (1, 2H)   f32
        "b_fc": params["b_fc"],                             # (1, 1)    f32
    }
    if L > 1:
        packed["w_in"] = jnp.stack(w_in).astype(jnp.bfloat16)  # (L-1, 2H, 8H)
    return packed


# ---------------------------------------------------------------------------
# Kernel
# ---------------------------------------------------------------------------

def _make_kernel(seq_len, batch, hidden, num_layers):
    H2 = 2 * hidden        # per-gate width (both directions concatenated)
    G = 8 * hidden         # packed gate width
    L = num_layers

    def kernel(*refs):
        x_ref, w_l0x_ref, w_rec_ref = refs[0], refs[1], refs[2]
        idx = 3
        if L > 1:
            w_in_ref = refs[idx]
            idx += 1
        b_ref = refs[idx]
        w_fc_ref = refs[idx + 1]
        b_fc_ref = refs[idx + 2]
        out_ref = refs[idx + 3]

        # ---- hoisted loads / broadcasts (stay resident in vregs) -----------
        w_rec = [w_rec_ref[l] for l in range(L)]                        # (2H, 8H) bf16
        w_in = [w_in_ref[l] for l in range(L - 1)] if L > 1 else []     # (2H, 8H) bf16
        b_bc = [jnp.broadcast_to(b_ref[l], (batch, G)) for l in range(1, L)]
        w_fc_bc = jnp.broadcast_to(w_fc_ref[...], (batch, H2))
        b_fc_bc = jnp.broadcast_to(b_fc_ref[...], (batch, 1))

        # ---- layer-0 input projection for ALL timesteps: one MXU matmul ----
        # x_ref is (T*B, in_dim) bf16; layer-0 bias folded in once, outside the loop.
        xw = (jnp.dot(x_ref[...], w_l0x_ref[...],
                      preferred_element_type=jnp.float32)
              + jnp.broadcast_to(b_ref[0], (seq_len * batch, G)))       # (T*B, 8H) f32

        # Recurrent state.  h is only ever consumed as an MXU LHS -> carry as bf16;
        # c is accumulated -> f32.
        h = [jnp.zeros((batch, H2), jnp.bfloat16) for _ in range(L)]
        c = [jnp.zeros((batch, H2), jnp.float32) for _ in range(L)]

        # T=8: fully unrolled is fine.  For much larger seq_len, switch to
        # lax.fori_loop (small unroll) or a time grid axis to bound vreg live ranges.
        for t in range(seq_len):
            h_f32 = None
            for l in range(L):
                if l == 0:
                    # xw already holds x_t @ W_ih + b, so only the recurrent dot
                    # (K = 2H) sits on the per-step critical path.
                    gates = (xw[t * batch:(t + 1) * batch, :]
                             + jnp.dot(h[0], w_rec[0],
                                       preferred_element_type=jnp.float32))
                else:
                    # Two accumulating dots instead of a lane concat + one dot.
                    gates = (jnp.dot(h[l - 1], w_in[l - 1],
                                     preferred_element_type=jnp.float32)
                             + jnp.dot(h[l], w_rec[l],
                                       preferred_element_type=jnp.float32)
                             + b_bc[l - 1])                             # (B, 8H)
                # Sigmoid lanes were pre-scaled by 0.5 host-side -> a single
                # whole-vreg tanh realizes all four gates.
                th = jnp.tanh(gates)
                i_g = 0.5 * th[:, 0:H2] + 0.5
                f_g = 0.5 * th[:, H2:2 * H2] + 0.5
                o_g = 0.5 * th[:, 2 * H2:3 * H2] + 0.5
                g_g = th[:, 3 * H2:4 * H2]
                c_new = f_g * c[l] + i_g * g_g
                h_f32 = o_g * jnp.tanh(c_new)                           # (B, 2H) f32
                c[l] = c_new
                h[l] = h_f32.astype(jnp.bfloat16)
            # Fused Linear(2H -> 1) + sigmoid head on the final layer's hidden:
            # VPU multiply + lane reduce + tiny store, no VMEM scratch round-trip.
            logit = (jnp.sum(h_f32 * w_fc_bc, axis=-1, keepdims=True)
                     + b_fc_bc)                                         # (B, 1)
            out_ref[t] = 0.5 * jnp.tanh(0.5 * logit) + 0.5

    return kernel


def lstom_pallas(x, params, *, num_layers, hidden):
    seq_len, batch, input_dim = x.shape
    L, H = num_layers, hidden

    packed = _pack_params(params, H, L)
    # Flatten time into rows so the layer-0 projection is a single in-kernel matmul.
    x_flat = x.reshape(seq_len * batch, input_dim).astype(jnp.bfloat16)

    inputs = [x_flat, packed["w_l0x"], packed["w_rec"]]
    if L > 1:
        inputs.append(packed["w_in"])
    inputs += [packed["b_all"], packed["w_fc"], packed["b_fc"]]

    def full_spec(a):
        n = a.ndim
        return pl.BlockSpec(a.shape, lambda t, n=n: (0,) * n)

    kernel = _make_kernel(seq_len, batch, H, L)

    # Whole recurrence in ONE invocation.  At these shapes the kernel is latency-bound
    # through the serial (layer, step) chain; VMEM footprint is a few tens of KiB on
    # every generation (incl. v7x's 64 MiB), so no vmem_limit / tiling overrides and
    # no batch sharding across TensorCores.  To use a second core, batch independent
    # LStoM sequences into one call via an extra leading "parallel" grid axis.
    return pl.pallas_call(
        kernel,
        out_shape=jax.ShapeDtypeStruct((seq_len, batch, 1), jnp.float32),
        grid_spec=pltpu.PrefetchScalarGridSpec(
            num_scalar_prefetch=0,
            grid=(1,),
            in_specs=[full_spec(a) for a in inputs],
            out_specs=pl.BlockSpec((seq_len, batch, 1), lambda t: (0, 0, 0)),
        ),
        compiler_params=pltpu.CompilerParams(
            dimension_semantics=("arbitrary",)),
    )(*inputs)


# ---------------------------------------------------------------------------
# Pure-JAX reference (mirrors the PyTorch per-timestep stepping, f32 math)
# ---------------------------------------------------------------------------

def lstom_ref(x, params, *, num_layers, hidden):
    L, H = num_layers, hidden
    seq_len, batch, _ = x.shape
    hp = jax.lax.Precision.HIGHEST
    h = [jnp.zeros((batch, H), jnp.float32) for _ in range(2 * L)]
    c = [jnp.zeros((batch, H), jnp.float32) for _ in range(2 * L)]
    outs = []
    for t in range(seq_len):
        layer_in = x[t]
        for l in range(L):
            dir_outs = []
            for d in range(2):
                w_ih, w_hh, b = params["lstm"][l][d]
                s = l * 2 + d
                gates = (jnp.dot(layer_in, w_ih.T, precision=hp)
                         + jnp.dot(h[s], w_hh.T, precision=hp) + b)
                i_g = jax.nn.sigmoid(gates[:, 0:H])
                f_g = jax.nn.sigmoid(gates[:, H:2 * H])
                g_g = jnp.tanh(gates[:, 2 * H:3 * H])
                o_g = jax.nn.sigmoid(gates[:, 3 * H:4 * H])
                c[s] = f_g * c[s] + i_g * g_g
                h[s] = o_g * jnp.tanh(c[s])
                dir_outs.append(h[s])
            layer_in = jnp.concatenate(dir_outs, axis=-1)
        y = jax.nn.sigmoid(jnp.dot(layer_in, params["w_fc"].T, precision=hp)
                           + params["b_fc"])
        outs.append(y[None])
    return jnp.concatenate(outs, axis=0)


def init_params(key, input_dim, hidden, num_layers):
    """Deterministic init mirroring PyTorch LSTM/Linear uniform init shapes."""
    stdv = 1.0 / math.sqrt(hidden)

    def u(k, shape, s):
        return jax.random.uniform(k, shape, jnp.float32, -s, s)

    params = {"lstm": []}
    for l in range(num_layers):
        in_dim = input_dim if l == 0 else 2 * hidden
        dirs = []
        for _d in range(2):
            key, k1, k2, k3, k4 = jax.random.split(key, 5)
            w_ih = u(k1, (4 * hidden, in_dim), stdv)
            w_hh = u(k2, (4 * hidden, hidden), stdv)
            # combine b_ih + b_hh into a single bias, kept 2-D for VMEM layout
            b = (u(k3, (4 * hidden,), stdv)
                 + u(k4, (4 * hidden,), stdv)).reshape(1, 4 * hidden)
            dirs.append((w_ih, w_hh, b))
        params["lstm"].append(dirs)

    fc_std = 1.0 / math.sqrt(2 * hidden)
    key, k1, k2 = jax.random.split(key, 3)
    params["w_fc"] = u(k1, (1, 2 * hidden), fc_std)
    params["b_fc"] = u(k2, (1, 1), fc_std)
    return params


if __name__ == "__main__":
    seq_len, batch, input_dim, hidden, num_layers = 8, 4, 8, 16, 2

    key = jax.random.PRNGKey(0)
    kx, kp = jax.random.split(key)
    x = jax.random.normal(kx, (seq_len, batch, input_dim), jnp.float32)
    params = init_params(kp, input_dim, hidden, num_layers)

    out = lstom_pallas(x, params, num_layers=num_layers, hidden=hidden)
    out = jax.block_until_ready(out)

    ref = lstom_ref(x, params, num_layers=num_layers, hidden=hidden)
    # Tolerance accommodates bf16 MXU operands (weights / x / carried h are bf16;
    # all accumulation and elementwise math is f32).  Structural errors (packing,
    # gate order, recurrence) would be orders of magnitude larger than this.
    np.testing.assert_allclose(np.asarray(out), np.asarray(ref),
                               rtol=1e-2, atol=2e-2)
    assert out.shape == (seq_len, batch, 1)
    print("KERNEL_OK")
</pallas_src>

<mosaic_0001>
module attributes {stable_mosaic.version = 11 : i64} {
  func.func @kernel(%arg0: i32, %arg1: memref<32x8xbf16, #tpu.memory_space<vmem>>, %arg2: memref<8x128xbf16, #tpu.memory_space<vmem>>, %arg3: memref<2x32x128xbf16, #tpu.memory_space<vmem>>, %arg4: memref<1x32x128xbf16, #tpu.memory_space<vmem>>, %arg5: memref<2x1x128xf32, #tpu.memory_space<vmem>>, %arg6: memref<1x32xf32, #tpu.memory_space<vmem>>, %arg7: memref<1x1xf32, #tpu.memory_space<vmem>>, %arg8: memref<8x4x1xf32, #tpu.memory_space<vmem>>) attributes {dimension_semantics = [#tpu.dimension_semantics<arbitrary>], iteration_bounds = array<i64: 1>, scalar_prefetch = 0 : i64, scratch_operands = 0 : i64, tpu.core_type = #tpu.core_type<tc>, window_params = [{pipeline_mode = #tpu.pipeline_mode<synchronous>, transform_indices = @transform_0, window_bounds = array<i64: 32, 8>}, {pipeline_mode = #tpu.pipeline_mode<synchronous>, transform_indices = @transform_1, window_bounds = array<i64: 8, 128>}, {pipeline_mode = #tpu.pipeline_mode<synchronous>, transform_indices = @transform_2, window_bounds = array<i64: 2, 32, 128>}, {pipeline_mode = #tpu.pipeline_mode<synchronous>, transform_indices = @transform_3, window_bounds = array<i64: 1, 32, 128>}, {pipeline_mode = #tpu.pipeline_mode<synchronous>, transform_indices = @transform_4, window_bounds = array<i64: 2, 1, 128>}, {pipeline_mode = #tpu.pipeline_mode<synchronous>, transform_indices = @transform_5, window_bounds = array<i64: 1, 32>}, {pipeline_mode = #tpu.pipeline_mode<synchronous>, transform_indices = @transform_6, window_bounds = array<i64: 1, 1>}, {pipeline_mode = #tpu.pipeline_mode<synchronous>, transform_indices = @transform_7, window_bounds = array<i64: 8, 4, 1>}]} {
    %c0 = arith.constant 0 : index
    %c0_0 = arith.constant 0 : index
    %c0_1 = arith.constant 0 : index
    %0 = vector.load %arg3[%c0, %c0_0, %c0_1] : memref<2x32x128xbf16, #tpu.memory_space<vmem>>, vector<1x32x128xbf16>
    %1 = vector.shape_cast %0 : vector<1x32x128xbf16> to vector<32x128xbf16>
    %c1 = arith.constant 1 : index
    %c0_2 = arith.constant 0 : index
    %c0_3 = arith.constant 0 : index
    %2 = vector.load %arg3[%c1, %c0_2, %c0_3] : memref<2x32x128xbf16, #tpu.memory_space<vmem>>, vector<1x32x128xbf16>
    %3 = vector.shape_cast %2 : vector<1x32x128xbf16> to vector<32x128xbf16>
    %c0_4 = arith.constant 0 : index
    %c0_5 = arith.constant 0 : index
    %c0_6 = arith.constant 0 : index
    %4 = vector.load %arg4[%c0_4, %c0_5, %c0_6] : memref<1x32x128xbf16, #tpu.memory_space<vmem>>, vector<1x32x128xbf16>
    %5 = vector.shape_cast %4 : vector<1x32x128xbf16> to vector<32x128xbf16>
    %c1_7 = arith.constant 1 : index
    %c0_8 = arith.constant 0 : index
    %c0_9 = arith.constant 0 : index
    %6 = vector.load %arg5[%c1_7, %c0_8, %c0_9] : memref<2x1x128xf32, #tpu.memory_space<vmem>>, vector<1x1x128xf32>
    %7 = vector.shape_cast %6 : vector<1x1x128xf32> to vector<1x128xf32>
    %8 = vector.shape_cast %7 : vector<1x128xf32> to vector<1x128xf32>
    %9 = vector.broadcast %8 : vector<1x128xf32> to vector<4x128xf32>
    %c0_10 = arith.constant 0 : index
    %c0_11 = arith.constant 0 : index
    %10 = vector.load %arg6[%c0_10, %c0_11] : memref<1x32xf32, #tpu.memory_space<vmem>>, vector<1x32xf32>
    %11 = vector.shape_cast %10 : vector<1x32xf32> to vector<1x32xf32>
    %12 = vector.broadcast %11 : vector<1x32xf32> to vector<4x32xf32>
    %c0_12 = arith.constant 0 : index
    %c0_13 = arith.constant 0 : index
    %13 = vector.load %arg7[%c0_12, %c0_13] : memref<1x1xf32, #tpu.memory_space<vmem>>, vector<1x1xf32>
    %14 = vector.shape_cast %13 : vector<1x1xf32> to vector<1x1xf32>
    %15 = vector.broadcast %14 : vector<1x1xf32> to vector<4x1xf32>
    %c0_14 = arith.constant 0 : index
    %c0_15 = arith.constant 0 : index
    %16 = vector.load %arg1[%c0_14, %c0_15] : memref<32x8xbf16, #tpu.memory_space<vmem>>, vector<32x8xbf16>
    %c0_16 = arith.constant 0 : index
    %c0_17 = arith.constant 0 : index
    %17 = vector.load %arg2[%c0_16, %c0_17] : memref<8x128xbf16, #tpu.memory_space<vmem>>, vector<8x128xbf16>
    %cst = arith.constant dense<0.000000e+00> : vector<32x128xf32>
    %18 = tpu.matmul %16, %17, %cst {dimension_numbers = #tpu.dot_dimension_numbers<[1], [0], [0], [1], [0, 0, 1, 1], [], []>} : vector<32x8xbf16>, vector<8x128xbf16>, vector<32x128xf32> -> vector<32x128xf32>
    %c0_18 = arith.constant 0 : index
    %c0_19 = arith.constant 0 : index
    %c0_20 = arith.constant 0 : index
    %19 = vector.load %arg5[%c0_18, %c0_19, %c0_20] : memref<2x1x128xf32, #tpu.memory_space<vmem>>, vector<1x1x128xf32>
    %20 = vector.shape_cast %19 : vector<1x1x128xf32> to vector<1x128xf32>
    %21 = vector.shape_cast %20 : vector<1x128xf32> to vector<1x128xf32>
    %22 = vector.broadcast %21 : vector<1x128xf32> to vector<32x128xf32>
    %23 = arith.addf %18, %22 : vector<32x128xf32>
    %cst_21 = arith.constant 0.000000e+00 : bf16
    %24 = vector.broadcast %cst_21 : bf16 to vector<4x32xbf16>
    %cst_22 = arith.constant 0.000000e+00 : bf16
    %25 = vector.broadcast %cst_22 : bf16 to vector<4x32xbf16>
    %cst_23 = arith.constant 0.000000e+00 : f32
    %26 = vector.broadcast %cst_23 : f32 to vector<4x32xf32>
    %cst_24 = arith.constant 0.000000e+00 : f32
    %27 = vector.broadcast %cst_24 : f32 to vector<4x32xf32>
    %28 = vector.extract_strided_slice %23 {offsets = [0, 0], sizes = [4, 128], strides = [1, 1]} : vector<32x128xf32> to vector<4x128xf32>
    %cst_25 = arith.constant dense<0.000000e+00> : vector<4x128xf32>
    %29 = tpu.matmul %24, %1, %cst_25 {dimension_numbers = #tpu.dot_dimension_numbers<[1], [0], [0], [1], [0, 0, 1, 1], [], []>} : vector<4x32xbf16>, vector<32x128xbf16>, vector<4x128xf32> -> vector<4x128xf32>
    %30 = arith.addf %28, %29 : vector<4x128xf32>
    %31 = math.tanh %30 : vector<4x128xf32>
    %32 = vector.extract_strided_slice %31 {offsets = [0, 0], sizes = [4, 32], strides = [1, 1]} : vector<4x128xf32> to vector<4x32xf32>
    %cst_26 = arith.constant 5.000000e-01 : f32
    %33 = vector.broadcast %cst_26 : f32 to vector<4x32xf32>
    %34 = arith.mulf %33, %32 : vector<4x32xf32>
    %cst_27 = arith.constant 5.000000e-01 : f32
    %35 = vector.broadcast %cst_27 : f32 to vector<4x32xf32>
    %36 = arith.addf %34, %35 : vector<4x32xf32>
    %37 = vector.extract_strided_slice %31 {offsets = [0, 32], sizes = [4, 32], strides = [1, 1]} : vector<4x128xf32> to vector<4x32xf32>
    %cst_28 = arith.constant 5.000000e-01 : f32
    %38 = vector.broadcast %cst_28 : f32 to vector<4x32xf32>
    %39 = arith.mulf %38, %37 : vector<4x32xf32>
    %cst_29 = arith.constant 5.000000e-01 : f32
    %40 = vector.broadcast %cst_29 : f32 to vector<4x32xf32>
    %41 = arith.addf %39, %40 : vector<4x32xf32>
    %42 = vector.extract_strided_slice %31 {offsets = [0, 64], sizes = [4, 32], strides = [1, 1]} : vector<4x128xf32> to vector<4x32xf32>
    %cst_30 = arith.constant 5.000000e-01 : f32
    %43 = vector.broadcast %cst_30 : f32 to vector<4x32xf32>
    %44 = arith.mulf %43, %42 : vector<4x32xf32>
    %cst_31 = arith.constant 5.000000e-01 : f32
    %45 = vector.broadcast %cst_31 : f32 to vector<4x32xf32>
    %46 = arith.addf %44, %45 : vector<4x32xf32>
    %47 = vector.extract_strided_slice %31 {offsets = [0, 96], sizes = [4, 32], strides = [1, 1]} : vector<4x128xf32> to vector<4x32xf32>
    %48 = arith.mulf %41, %26 : vector<4x32xf32>
    %49 = arith.mulf %36, %47 : vector<4x32xf32>
    %50 = arith.addf %48, %49 : vector<4x32xf32>
    %51 = math.tanh %50 : vector<4x32xf32>
    %52 = arith.mulf %46, %51 : vector<4x32xf32>
    %53 = arith.truncf %52 : vector<4x32xf32> to vector<4x32xbf16>
    %cst_32 = arith.constant dense<0.000000e+00> : vector<4x128xf32>
    %54 = tpu.matmul %53, %5, %cst_32 {dimension_numbers = #tpu.dot_dimension_numbers<[1], [0], [0], [1], [0, 0, 1, 1], [], []>} : vector<4x32xbf16>, vector<32x128xbf16>, vector<4x128xf32> -> vector<4x128xf32>
    %cst_33 = arith.constant dense<0.000000e+00> : vector<4x128xf32>
    %55 = tpu.matmul %25, %3, %cst_33 {dimension_numbers = #tpu.dot_dimension_numbers<[1], [0], [0], [1], [0, 0, 1, 1], [], []>} : vector<4x32xbf16>, vector<32x128xbf16>, vector<4x128xf32> -> vector<4x128xf32>
    %56 = arith.addf %54, %55 : vector<4x128xf32>
    %57 = arith.addf %56, %9 : vector<4x128xf32>
    %58 = math.tanh %57 : vector<4x128xf32>
    %59 = vector.extract_strided_slice %58 {offsets = [0, 0], sizes = [4, 32], strides = [1, 1]} : vector<4x128xf32> to vector<4x32xf32>
    %cst_34 = arith.constant 5.000000e-01 : f32
    %60 = vector.broadcast %cst_34 : f32 to vector<4x32xf32>
    %61 = arith.mulf %60, %59 : vector<4x32xf32>
    %cst_35 = arith.constant 5.000000e-01 : f32
    %62 = vector.broadcast %cst_35 : f32 to vector<4x32xf32>
    %63 = arith.addf %61, %62 : vector<4x32xf32>
    %64 = vector.extract_strided_slice %58 {offsets = [0, 32], sizes = [4, 32], strides = [1, 1]} : vector<4x128xf32> to vector<4x32xf32>
    %cst_36 = arith.constant 5.000000e-01 : f32
    %65 = vector.broadcast %cst_36 : f32 to vector<4x32xf32>
    %66 = arith.mulf %65, %64 : vector<4x32xf32>
    %cst_37 = arith.constant 5.000000e-01 : f32
    %67 = vector.broadcast %cst_37 : f32 to vector<4x32xf32>
    %68 = arith.addf %66, %67 : vector<4x32xf32>
    %69 = vector.extract_strided_slice %58 {offsets = [0, 64], sizes = [4, 32], strides = [1, 1]} : vector<4x128xf32> to vector<4x32xf32>
    %cst_38 = arith.constant 5.000000e-01 : f32
    %70 = vector.broadcast %cst_38 : f32 to vector<4x32xf32>
    %71 = arith.mulf %70, %69 : vector<4x32xf32>
    %cst_39 = arith.constant 5.000000e-01 : f32
    %72 = vector.broadcast %cst_39 : f32 to vector<4x32xf32>
    %73 = arith.addf %71, %72 : vector<4x32xf32>
    %74 = vector.extract_strided_slice %58 {offsets = [0, 96], sizes = [4, 32], strides = [1, 1]} : vector<4x128xf32> to vector<4x32xf32>
    %75 = arith.mulf %68, %27 : vector<4x32xf32>
    %76 = arith.mulf %63, %74 : vector<4x32xf32>
    %77 = arith.addf %75, %76 : vector<4x32xf32>
    %78 = math.tanh %77 : vector<4x32xf32>
    %79 = arith.mulf %73, %78 : vector<4x32xf32>
    %80 = arith.truncf %79 : vector<4x32xf32> to vector<4x32xbf16>
    %81 = arith.mulf %79, %12 : vector<4x32xf32>
    %cst_40 = arith.constant dense<0.000000e+00> : vector<4xf32>
    %82 = vector.multi_reduction <add>, %81, %cst_40 [1] : vector<4x32xf32> to vector<4xf32>
    %83 = vector.shape_cast %82 : vector<4xf32> to vector<4x1xf32>
    %84 = arith.addf %83, %15 : vector<4x1xf32>
    %cst_41 = arith.constant 5.000000e-01 : f32
    %85 = vector.broadcast %cst_41 : f32 to vector<4x1xf32>
    %86 = arith.mulf %85, %84 : vector<4x1xf32>
    %87 = math.tanh %86 : vector<4x1xf32>
    %cst_42 = arith.constant 5.000000e-01 : f32
    %88 = vector.broadcast %cst_42 : f32 to vector<4x1xf32>
    %89 = arith.mulf %88, %87 : vector<4x1xf32>
    %cst_43 = arith.constant 5.000000e-01 : f32
    %90 = vector.broadcast %cst_43 : f32 to vector<4x1xf32>
    %91 = arith.addf %89, %90 : vector<4x1xf32>
    %c0_44 = arith.constant 0 : index
    %c0_45 = arith.constant 0 : index
    %c0_46 = arith.constant 0 : index
    %92 = vector.load %arg8[%c0_44, %c0_45, %c0_46] : memref<8x4x1xf32, #tpu.memory_space<vmem>>, vector<1x4x1xf32>
    %93 = vector.shape_cast %92 : vector<1x4x1xf32> to vector<4x1xf32>
    %94 = vector.shape_cast %91 : vector<4x1xf32> to vector<1x4x1xf32>
    tpu.vector_store %arg8[%c0_44, %c0_45, %c0_46], %94 {strides = array<i32>} : memref<8x4x1xf32, #tpu.memory_space<vmem>>, vector<1x4x1xf32>,
    %95 = vector.extract_strided_slice %23 {offsets = [4, 0], sizes = [4, 128], strides = [1, 1]} : vector<32x128xf32> to vector<4x128xf32>
    %cst_47 = arith.constant dense<0.000000e+00> : vector<4x128xf32>
    %96 = tpu.matmul %53, %1, %cst_47 {dimension_numbers = #tpu.dot_dimension_numbers<[1], [0], [0], [1], [0, 0, 1, 1], [], []>} : vector<4x32xbf16>, vector<32x128xbf16>, vector<4x128xf32> -> vector<4x128xf32>
    %97 = arith.addf %95, %96 : vector<4x128xf32>
    %98 = math.tanh %97 : vector<4x128xf32>
    %99 = vector.extract_strided_slice %98 {offsets = [0, 0], sizes = [4, 32], strides = [1, 1]} : vector<4x128xf32> to vector<4x32xf32>
    %cst_48 = arith.constant 5.000000e-01 : f32
    %100 = vector.broadcast %cst_48 : f32 to vector<4x32xf32>
    %101 = arith.mulf %100, %99 : vector<4x32xf32>
    %cst_49 = arith.constant 5.000000e-01 : f32
    %102 = vector.broadcast %cst_49 : f32 to vector<4x32xf32>
    %103 = arith.addf %101, %102 : vector<4x32xf32>
    %104 = vector.extract_strided_slice %98 {offsets = [0, 32], sizes = [4, 32], strides = [1, 1]} : vector<4x128xf32> to vector<4x32xf32>
    %cst_50 = arith.constant 5.000000e-01 : f32
    %105 = vector.broadcast %cst_50 : f32 to vector<4x32xf32>
    %106 = arith.mulf %105, %104 : vector<4x32xf32>
    %cst_51 = arith.constant 5.000000e-01 : f32
    %107 = vector.broadcast %cst_51 : f32 to vector<4x32xf32>
    %108 = arith.addf %106, %107 : vector<4x32xf32>
    %109 = vector.extract_strided_slice %98 {offsets = [0, 64], sizes = [4, 32], strides = [1, 1]} : vector<4x128xf32> to vector<4x32xf32>
    %cst_52 = arith.constant 5.000000e-01 : f32
    %110 = vector.broadcast %cst_52 : f32 to vector<4x32xf32>
    %111 = arith.mulf %110, %109 : vector<4x32xf32>
    %cst_53 = arith.constant 5.000000e-01 : f32
    %112 = vector.broadcast %cst_53 : f32 to vector<4x32xf32>
    %113 = arith.addf %111, %112 : vector<4x32xf32>
    %114 = vector.extract_strided_slice %98 {offsets = [0, 96], sizes = [4, 32], strides = [1, 1]} : vector<4x128xf32> to vector<4x32xf32>
    %115 = arith.mulf %108, %50 : vector<4x32xf32>
    %116 = arith.mulf %103, %114 : vector<4x32xf32>
    %117 = arith.addf %115, %116 : vector<4x32xf32>
    %118 = math.tanh %117 : vector<4x32xf32>
    %119 = arith.mulf %113, %118 : vector<4x32xf32>
    %120 = arith.truncf %119 : vector<4x32xf32> to vector<4x32xbf16>
    %cst_54 = arith.constant dense<0.000000e+00> : vector<4x128xf32>
    %121 = tpu.matmul %120, %5, %cst_54 {dimension_numbers = #tpu.dot_dimension_numbers<[1], [0], [0], [1], [0, 0, 1, 1], [], []>} : vector<4x32xbf16>, vector<32x128xbf16>, vector<4x128xf32> -> vector<4x128xf32>
    %cst_55 = arith.constant dense<0.000000e+00> : vector<4x128xf32>
    %122 = tpu.matmul %80, %3, %cst_55 {dimension_numbers = #tpu.dot_dimension_numbers<[1], [0], [0], [1], [0, 0, 1, 1], [], []>} : vector<4x32xbf16>, vector<32x128xbf16>, vector<4x128xf32> -> vector<4x128xf32>
    %123 = arith.addf %121, %122 : vector<4x128xf32>
    %124 = arith.addf %123, %9 : vector<4x128xf32>
    %125 = math.tanh %124 : vector<4x128xf32>
    %126 = vector.extract_strided_slice %125 {offsets = [0, 0], sizes = [4, 32], strides = [1, 1]} : vector<4x128xf32> to vector<4x32xf32>
    %cst_56 = arith.constant 5.000000e-01 : f32
    %127 = vector.broadcast %cst_56 : f32 to vector<4x32xf32>
    %128 = arith.mulf %127, %126 : vector<4x32xf32>
    %cst_57 = arith.constant 5.000000e-01 : f32
    %129 = vector.broadcast %cst_57 : f32 to vector<4x32xf32>
    %130 = arith.addf %128, %129 : vector<4x32xf32>
    %131 = vector.extract_strided_slice %125 {offsets = [0, 32], sizes = [4, 32], strides = [1, 1]} : vector<4x128xf32> to vector<4x32xf32>
    %cst_58 = arith.constant 5.000000e-01 : f32
    %132 = vector.broadcast %cst_58 : f32 to vector<4x32xf32>
    %133 = arith.mulf %132, %131 : vector<4x32xf32>
    %cst_59 = arith.constant 5.000000e-01 : f32
    %134 = vector.broadcast %cst_59 : f32 to vector<4x32xf32>
    %135 = arith.addf %133, %134 : vector<4x32xf32>
    %136 = vector.extract_strided_slice %125 {offsets = [0, 64], sizes = [4, 32], strides = [1, 1]} : vector<4x128xf32> to vector<4x32xf32>
    %cst_60 = arith.constant 5.000000e-01 : f32
    %137 = vector.broadcast %cst_60 : f32 to vector<4x32xf32>
    %138 = arith.mulf %137, %136 : vector<4x32xf32>
    %cst_61 = arith.constant 5.000000e-01 : f32
    %139 = vector.broadcast %cst_61 : f32 to vector<4x32xf32>
    %140 = arith.addf %138, %139 : vector<4x32xf32>
    %141 = vector.extract_strided_slice %125 {offsets = [0, 96], sizes = [4, 32], strides = [1, 1]} : vector<4x128xf32> to vector<4x32xf32>
    %142 = arith.mulf %135, %77 : vector<4x32xf32>
    %143 = arith.mulf %130, %141 : vector<4x32xf32>
    %144 = arith.addf %142, %143 : vector<4x32xf32>
    %145 = math.tanh %144 : vector<4x32xf32>
    %146 = arith.mulf %140, %145 : vector<4x32xf32>
    %147 = arith.truncf %146 : vector<4x32xf32> to vector<4x32xbf16>
    %148 = arith.mulf %146, %12 : vector<4x32xf32>
    %cst_62 = arith.constant dense<0.000000e+00> : vector<4xf32>
    %149 = vector.multi_reduction <add>, %148, %cst_62 [1] : vector<4x32xf32> to vector<4xf32>
    %150 = vector.shape_cast %149 : vector<4xf32> to vector<4x1xf32>
    %151 = arith.addf %150, %15 : vector<4x1xf32>
    %cst_63 = arith.constant 5.000000e-01 : f32
    %152 = vector.broadcast %cst_63 : f32 to vector<4x1xf32>
    %153 = arith.mulf %152, %151 : vector<4x1xf32>
    %154 = math.tanh %153 : vector<4x1xf32>
    %cst_64 = arith.constant 5.000000e-01 : f32
    %155 = vector.broadcast %cst_64 : f32 to vector<4x1xf32>
    %156 = arith.mulf %155, %154 : vector<4x1xf32>
    %cst_65 = arith.constant 5.000000e-01 : f32
    %157 = vector.broadcast %cst_65 : f32 to vector<4x1xf32>
    %158 = arith.addf %156, %157 : vector<4x1xf32>
    %c1_66 = arith.constant 1 : index
    %c0_67 = arith.constant 0 : index
    %c0_68 = arith.constant 0 : index
    %159 = vector.load %arg8[%c1_66, %c0_67, %c0_68] : memref<8x4x1xf32, #tpu.memory_space<vmem>>, vector<1x4x1xf32>
    %160 = vector.shape_cast %159 : vector<1x4x1xf32> to vector<4x1xf32>
    %161 = vector.shape_cast %158 : vector<4x1xf32> to vector<1x4x1xf32>
    tpu.vector_store %arg8[%c1_66, %c0_67, %c0_68], %161 {strides = array<i32>} : memref<8x4x1xf32, #tpu.memory_space<vmem>>, vector<1x4x1xf32>,
    %162 = vector.extract_strided_slice %23 {offsets = [8, 0], sizes = [4, 128], strides = [1, 1]} : vector<32x128xf32> to vector<4x128xf32>
    %cst_69 = arith.constant dense<0.000000e+00> : vector<4x128xf32>
    %163 = tpu.matmul %120, %1, %cst_69 {dimension_numbers = #tpu.dot_dimension_numbers<[1], [0], [0], [1], [0, 0, 1, 1], [], []>} : vector<4x32xbf16>, vector<32x128xbf16>, vector<4x128xf32> -> vector<4x128xf32>
    %164 = arith.addf %162, %163 : vector<4x128xf32>
    %165 = math.tanh %164 : vector<4x128xf32>
    %166 = vector.extract_strided_slice %165 {offsets = [0, 0], sizes = [4, 32], strides = [1, 1]} : vector<4x128xf32> to vector<4x32xf32>
    %cst_70 = arith.constant 5.000000e-01 : f32
    %167 = vector.broadcast %cst_70 : f32 to vector<4x32xf32>
    %168 = arith.mulf %167, %166 : vector<4x32xf32>
    %cst_71 = arith.constant 5.000000e-01 : f32
    %169 = vector.broadcast %cst_71 : f32 to vector<4x32xf32>
    %170 = arith.addf %168, %169 : vector<4x32xf32>
    %171 = vector.extract_strided_slice %165 {offsets = [0, 32], sizes = [4, 32], strides = [1, 1]} : vector<4x128xf32> to vector<4x32xf32>
    %cst_72 = arith.constant 5.000000e-01 : f32
    %172 = vector.broadcast %cst_72 : f32 to vector<4x32xf32>
    %173 = arith.mulf %172, %171 : vector<4x32xf32>
    %cst_73 = arith.constant 5.000000e-01 : f32
    %174 = vector.broadcast %cst_73 : f32 to vector<4x32xf32>
    %175 = arith.addf %173, %174 : vector<4x32xf32>
    %176 = vector.extract_strided_slice %165 {offsets = [0, 64], sizes = [4, 32], strides = [1, 1]} : vector<4x128xf32> to vector<4x32xf32>
    %cst_74 = arith.constant 5.000000e-01 : f32
    %177 = vector.broadcast %cst_74 : f32 to vector<4x32xf32>
    %178 = arith.mulf %177, %176 : vector<4x32xf32>
    %cst_75 = arith.constant 5.000000e-01 : f32
    %179 = vector.broadcast %cst_75 : f32 to vector<4x32xf32>
    %180 = arith.addf %178, %179 : vector<4x32xf32>
    %181 = vector.extract_strided_slice %165 {offsets = [0, 96], sizes = [4, 32], strides = [1, 1]} : vector<4x128xf32> to vector<4x32xf32>
    %182 = arith.mulf %175, %117 : vector<4x32xf32>
    %183 = arith.mulf %170, %181 : vector<4x32xf32>
    %184 = arith.addf %182, %183 : vector<4x32xf32>
    %185 = math.tanh %184 : vector<4x32xf32>
    %186 = arith.mulf %180, %185 : vector<4x32xf32>
    %187 = arith.truncf %186 : vector<4x32xf32> to vector<4x32xbf16>
    %cst_76 = arith.constant dense<0.000000e+00> : vector<4x128xf32>
    %188 = tpu.matmul %187, %5, %cst_76 {dimension_numbers = #tpu.dot_dimension_numbers<[1], [0], [0], [1], [0, 0, 1, 1], [], []>} : vector<4x32xbf16>, vector<32x128xbf16>, vector<4x128xf32> -> vector<4x128xf32>
    %cst_77 = arith.constant dense<0.000000e+00> : vector<4x128xf32>
    %189 = tpu.matmul %147, %3, %cst_77 {dimension_numbers = #tpu.dot_dimension_numbers<[1], [0], [0], [1], [0, 0, 1, 1], [], []>} : vector<4x32xbf16>, vector<32x128xbf16>, vector<4x128xf32> -> vector<4x128xf32>
    %190 = arith.addf %188, %189 : vector<4x128xf32>
    %191 = arith.addf %190, %9 : vector<4x128xf32>
    %192 = math.tanh %191 : vector<4x128xf32>
    %193 = vector.extract_strided_slice %192 {offsets = [0, 0], sizes = [4, 32], strides = [1, 1]} : vector<4x128xf32> to vector<4x32xf32>
    %cst_78 = arith.constant 5.000000e-01 : f32
    %194 = vector.broadcast %cst_78 : f32 to vector<4x32xf32>
    %195 = arith.mulf %194, %193 : vector<4x32xf32>
    %cst_79 = arith.constant 5.000000e-01 : f32
    %196 = vector.broadcast %cst_79 : f32 to vector<4x32xf32>
    %197 = arith.addf %195, %196 : vector<4x32xf32>
    %198 = vector.extract_strided_slice %192 {offsets = [0, 32], sizes = [4, 32], strides = [1, 1]} : vector<4x128xf32> to vector<4x32xf32>
    %cst_80 = arith.constant 5.000000e-01 : f32
    %199 = vector.broadcast %cst_80 : f32 to vector<4x32xf32>
    %200 = arith.mulf %199, %198 : vector<4x32xf32>
    %cst_81 = arith.constant 5.000000e-01 : f32
    %201 = vector.broadcast %cst_81 : f32 to vector<4x32xf32>
    %202 = arith.addf %200, %201 : vector<4x32xf32>
    %203 = vector.extract_strided_slice %192 {offsets = [0, 64], sizes = [4, 32], strides = [1, 1]} : vector<4x128xf32> to vector<4x32xf32>
    %cst_82 = arith.constant 5.000000e-01 : f32
    %204 = vector.broadcast %cst_82 : f32 to vector<4x32xf32>
    %205 = arith.mulf %204, %203 : vector<4x32xf32>
    %cst_83 = arith.constant 5.000000e-01 : f32
    %206 = vector.broadcast %cst_83 : f32 to vector<4x32xf32>
    %207 = arith.addf %205, %206 : vector<4x32xf32>
    %208 = vector.extract_strided_slice %192 {offsets = [0, 96], sizes = [4, 32], strides = [1, 1]} : vector<4x128xf32> to vector<4x32xf32>
    %209 = arith.mulf %202, %144 : vector<4x32xf32>
    %210 = arith.mulf %197, %208 : vector<4x32xf32>
    %211 = arith.addf %209, %210 : vector<4x32xf32>
    %212 = math.tanh %211 : vector<4x32xf32>
    %213 = arith.mulf %207, %212 : vector<4x32xf32>
    %214 = arith.truncf %213 : vector<4x32xf32> to vector<4x32xbf16>
    %215 = arith.mulf %213, %12 : vector<4x32xf32>
    %cst_84 = arith.constant dense<0.000000e+00> : vector<4xf32>
    %216 = vector.multi_reduction <add>, %215, %cst_84 [1] : vector<4x32xf32> to vector<4xf32>
    %217 = vector.shape_cast %216 : vector<4xf32> to vector<4x1xf32>
    %218 = arith.addf %217, %15 : vector<4x1xf32>
    %cst_85 = arith.constant 5.000000e-01 : f32
    %219 = vector.broadcast %cst_85 : f32 to vector<4x1xf32>
    %220 = arith.mulf %219, %218 : vector<4x1xf32>
    %221 = math.tanh %220 : vector<4x1xf32>
    %cst_86 = arith.constant 5.000000e-01 : f32
    %222 = vector.broadcast %cst_86 : f32 to vector<4x1xf32>
    %223 = arith.mulf %222, %221 : vector<4x1xf32>
    %cst_87 = arith.constant 5.000000e-01 : f32
    %224 = vector.broadcast %cst_87 : f32 to vector<4x1xf32>
    %225 = arith.addf %223, %224 : vector<4x1xf32>
    %c2 = arith.constant 2 : index
    %c0_88 = arith.constant 0 : index
    %c0_89 = arith.constant 0 : index
    %226 = vector.load %arg8[%c2, %c0_88, %c0_89] : memref<8x4x1xf32, #tpu.memory_space<vmem>>, vector<1x4x1xf32>
    %227 = vector.shape_cast %226 : vector<1x4x1xf32> to vector<4x1xf32>
    %228 = vector.shape_cast %225 : vector<4x1xf32> to vector<1x4x1xf32>
    tpu.vector_store %arg8[%c2, %c0_88, %c0_89], %228 {strides = array<i32>} : memref<8x4x1xf32, #tpu.memory_space<vmem>>, vector<1x4x1xf32>,
    %229 = vector.extract_strided_slice %23 {offsets = [12, 0], sizes = [4, 128], strides = [1, 1]} : vector<32x128xf32> to vector<4x128xf32>
    %cst_90 = arith.constant dense<0.000000e+00> : vector<4x128xf32>
    %230 = tpu.matmul %187, %1, %cst_90 {dimension_numbers = #tpu.dot_dimension_numbers<[1], [0], [0], [1], [0, 0, 1, 1], [], []>} : vector<4x32xbf16>, vector<32x128xbf16>, vector<4x128xf32> -> vector<4x128xf32>
    %231 = arith.addf %229, %230 : vector<4x128xf32>
    %232 = math.tanh %231 : vector<4x128xf32>
    %233 = vector.extract_strided_slice %232 {offsets = [0, 0], sizes = [4, 32], strides = [1, 1]} : vector<4x128xf32> to vector<4x32xf32>
    %cst_91 = arith.constant 5.000000e-01 : f32
    %234 = vector.broadcast %cst_91 : f32 to vector<4x32xf32>
    %235 = arith.mulf %234, %233 : vector<4x32xf32>
    %cst_92 = arith.constant 5.000000e-01 : f32
    %236 = vector.broadcast %cst_92 : f32 to vector<4x32xf32>
    %237 = arith.addf %235, %236 : vector<4x32xf32>
    %238 = vector.extract_strided_slice %232 {offsets = [0, 32], sizes = [4, 32], strides = [1, 1]} : vector<4x128xf32> to vector<4x32xf32>
    %cst_93 = arith.constant 5.000000e-01 : f32
    %239 = vector.broadcast %cst_93 : f32 to vector<4x32xf32>
    %240 = arith.mulf %239, %238 : vector<4x32xf32>
    %cst_94 = arith.constant 5.000000e-01 : f32
    %241 = vector.broadcast %cst_94 : f32 to vector<4x32xf32>
    %242 = arith.addf %240, %241 : vector<4x32xf32>
    %243 = vector.extract_strided_slice %232 {offsets = [0, 64], sizes = [4, 32], strides = [1, 1]} : vector<4x128xf32> to vector<4x32xf32>
    %cst_95 = arith.constant 5.000000e-01 : f32
    %244 = vector.broadcast %cst_95 : f32 to vector<4x32xf32>
    %245 = arith.mulf %244, %243 : vector<4x32xf32>
    %cst_96 = arith.constant 5.000000e-01 : f32
    %246 = vector.broadcast %cst_96 : f32 to vector<4x32xf32>
    %247 = arith.addf %245, %246 : vector<4x32xf32>
    %248 = vector.extract_strided_slice %232 {offsets = [0, 96], sizes = [4, 32], strides = [1, 1]} : vector<4x128xf32> to vector<4x32xf32>
    %249 = arith.mulf %242, %184 : vector<4x32xf32>
    %250 = arith.mulf %237, %248 : vector<4x32xf32>
    %251 = arith.addf %249, %250 : vector<4x32xf32>
    %252 = math.tanh %251 : vector<4x32xf32>
    %253 = arith.mulf %247, %252 : vector<4x32xf32>
    %254 = arith.truncf %253 : vector<4x32xf32> to vector<4x32xbf16>
    %cst_97 = arith.constant dense<0.000000e+00> : vector<4x128xf32>
    %255 = tpu.matmul %254, %5, %cst_97 {dimension_numbers = #tpu.dot_dimension_numbers<[1], [0], [0], [1], [0, 0, 1, 1], [], []>} : vector<4x32xbf16>, vector<32x128xbf16>, vector<4x128xf32> -> vector<4x128xf32>
    %cst_98 = arith.constant dense<0.000000e+00> : vector<4x128xf32>
    %256 = tpu.matmul %214, %3, %cst_98 {dimension_numbers = #tpu.dot_dimension_numbers<[1], [0], [0], [1], [0, 0, 1, 1], [], []>} : vector<4x32xbf16>, vector<32x128xbf16>, vector<4x128xf32> -> vector<4x128xf32>
    %257 = arith.addf %255, %256 : vector<4x128xf32>
    %258 = arith.addf %257, %9 : vector<4x128xf32>
    %259 = math.tanh %258 : vector<4x128xf32>
    %260 = vector.extract_strided_slice %259 {offsets = [0, 0], sizes = [4, 32], strides = [1, 1]} : vector<4x128xf32> to vector<4x32xf32>
    %cst_99 = arith.constant 5.000000e-01 : f32
    %261 = vector.broadcast %cst_99 : f32 to vector<4x32xf32>
    %262 = arith.mulf %261, %260 : vector<4x32xf32>
    %cst_100 = arith.constant 5.000000e-01 : f32
    %263 = vector.broadcast %cst_100 : f32 to vector<4x32xf32>
    %264 = arith.addf %262, %263 : vector<4x32xf32>
    %265 = vector.extract_strided_slice %259 {offsets = [0, 32], sizes = [4, 32], strides = [1, 1]} : vector<4x128xf32> to vector<4x32xf32>
    %cst_101 = arith.constant 5.000000e-01 : f32
    %266 = vector.broadcast %cst_101 : f32 to vector<4x32xf32>
    %267 = arith.mulf %266, %265 : vector<4x32xf32>
    %cst_102 = arith.constant 5.000000e-01 : f32
    %268 = vector.broadcast %cst_102 : f32 to vector<4x32xf32>
    %269 = arith.addf %267, %268 : vector<4x32xf32>
    %270 = vector.extract_strided_slice %259 {offsets = [0, 64], sizes = [4, 32], strides = [1, 1]} : vector<4x128xf32> to vector<4x32xf32>
    %cst_103 = arith.constant 5.000000e-01 : f32
    %271 = vector.broadcast %cst_103 : f32 to vector<4x32xf32>
    %272 = arith.mulf %271, %270 : vector<4x32xf32>
    %cst_104 = arith.constant 5.000000e-01 : f32
    %273 = vector.broadcast %cst_104 : f32 to vector<4x32xf32>
    %274 = arith.addf %272, %273 : vector<4x32xf32>
    %275 = vector.extract_strided_slice %259 {offsets = [0, 96], sizes = [4, 32], strides = [1, 1]} : vector<4x128xf32> to vector<4x32xf32>
    %276 = arith.mulf %269, %211 : vector<4x32xf32>
    %277 = arith.mulf %264, %275 : vector<4x32xf32>
    %278 = arith.addf %276, %277 : vector<4x32xf32>
    %279 = math.tanh %278 : vector<4x32xf32>
    %280 = arith.mulf %274, %279 : vector<4x32xf32>
    %281 = arith.truncf %280 : vector<4x32xf32> to vector<4x32xbf16>
    %282 = arith.mulf %280, %12 : vector<4x32xf32>
    %cst_105 = arith.constant dense<0.000000e+00> : vector<4xf32>
    %283 = vector.multi_reduction <add>, %282, %cst_105 [1] : vector<4x32xf32> to vector<4xf32>
    %284 = vector.shape_cast %283 : vector<4xf32> to vector<4x1xf32>
    %285 = arith.addf %284, %15 : vector<4x1xf32>
    %cst_106 = arith.constant 5.000000e-01 : f32
    %286 = vector.broadcast %cst_106 : f32 to vector<4x1xf32>
    %287 = arith.mulf %286, %285 : vector<4x1xf32>
    %288 = math.tanh %287 : vector<4x1xf32>
    %cst_107 = arith.constant 5.000000e-01 : f32
    %289 = vector.broadcast %cst_107 : f32 to vector<4x1xf32>
    %290 = arith.mulf %289, %288 : vector<4x1xf32>
    %cst_108 = arith.constant 5.000000e-01 : f32
    %291 = vector.broadcast %cst_108 : f32 to vector<4x1xf32>
    %292 = arith.addf %290, %291 : vector<4x1xf32>
    %c3 = arith.constant 3 : index
    %c0_109 = arith.constant 0 : index
    %c0_110 = arith.constant 0 : index
    %293 = vector.load %arg8[%c3, %c0_109, %c0_110] : memref<8x4x1xf32, #tpu.memory_space<vmem>>, vector<1x4x1xf32>
    %294 = vector.shape_cast %293 : vector<1x4x1xf32> to vector<4x1xf32>
    %295 = vector.shape_cast %292 : vector<4x1xf32> to vector<1x4x1xf32>
    tpu.vector_store %arg8[%c3, %c0_109, %c0_110], %295 {strides = array<i32>} : memref<8x4x1xf32, #tpu.memory_space<vmem>>, vector<1x4x1xf32>,
    %296 = vector.extract_strided_slice %23 {offsets = [16, 0], sizes = [4, 128], strides = [1, 1]} : vector<32x128xf32> to vector<4x128xf32>
    %cst_111 = arith.constant dense<0.000000e+00> : vector<4x128xf32>
    %297 = tpu.matmul %254, %1, %cst_111 {dimension_numbers = #tpu.dot_dimension_numbers<[1], [0], [0], [1], [0, 0, 1, 1], [], []>} : vector<4x32xbf16>, vector<32x128xbf16>, vector<4x128xf32> -> vector<4x128xf32>
    %298 = arith.addf %296, %297 : vector<4x128xf32>
    %299 = math.tanh %298 : vector<4x128xf32>
    %300 = vector.extract_strided_slice %299 {offsets = [0, 0], sizes = [4, 32], strides = [1, 1]} : vector<4x128xf32> to vector<4x32xf32>
    %cst_112 = arith.constant 5.000000e-01 : f32
    %301 = vector.broadcast %cst_112 : f32 to vector<4x32xf32>
    %302 = arith.mulf %301, %300 : vector<4x32xf32>
    %cst_113 = arith.constant 5.000000e-01 : f32
    %303 = vector.broadcast %cst_113 : f32 to vector<4x32xf32>
    %304 = arith.addf %302, %303 : vector<4x32xf32>
    %305 = vector.extract_strided_slice %299 {offsets = [0, 32], sizes = [4, 32], strides = [1, 1]} : vector<4x128xf32> to vector<4x32xf32>
    %cst_114 = arith.constant 5.000000e-01 : f32
    %306 = vector.broadcast %cst_114 : f32 to vector<4x32xf32>
    %307 = arith.mulf %306, %305 : vector<4x32xf32>
    %cst_115 = arith.constant 5.000000e-01 : f32
    %308 = vector.broadcast %cst_115 : f32 to vector<4x32xf32>
    %309 = arith.addf %307, %308 : vector<4x32xf32>
    %310 = vector.extract_strided_slice %299 {offsets = [0, 64], sizes = [4, 32], strides = [1, 1]} : vector<4x128xf32> to vector<4x32xf32>
    %cst_116 = arith.constant 5.000000e-01 : f32
    %311 = vector.broadcast %cst_116 : f32 to vector<4x32xf32>
    %312 = arith.mulf %311, %310 : vector<4x32xf32>
    %cst_117 = arith.constant 5.000000e-01 : f32
    %313 = vector.broadcast %cst_117 : f32 to vector<4x32xf32>
    %314 = arith.addf %312, %313 : vector<4x32xf32>
    %315 = vector.extract_strided_slice %299 {offsets = [0, 96], sizes = [4, 32], strides = [1, 1]} : vector<4x128xf32> to vector<4x32xf32>
    %316 = arith.mulf %309, %251 : vector<4x32xf32>
    %317 = arith.mulf %304, %315 : vector<4x32xf32>
    %318 = arith.addf %316, %317 : vector<4x32xf32>
    %319 = math.tanh %318 : vector<4x32xf32>
    %320 = arith.mulf %314, %319 : vector<4x32xf32>
    %321 = arith.truncf %320 : vector<4x32xf32> to vector<4x32xbf16>
    %cst_118 = arith.constant dense<0.000000e+00> : vector<4x128xf32>
    %322 = tpu.matmul %321, %5, %cst_118 {dimension_numbers = #tpu.dot_dimension_numbers<[1], [0], [0], [1], [0, 0, 1, 1], [], []>} : vector<4x32xbf16>, vector<32x128xbf16>, vector<4x128xf32> -> vector<4x128xf32>
    %cst_119 = arith.constant dense<0.000000e+00> : vector<4x128xf32>
    %323 = tpu.matmul %281, %3, %cst_119 {dimension_numbers = #tpu.dot_dimension_numbers<[1], [0], [0], [1], [0, 0, 1, 1], [], []>} : vector<4x32xbf16>, vector<32x128xbf16>, vector<4x128xf32> -> vector<4x128xf32>
    %324 = arith.addf %322, %323 : vector<4x128xf32>
    %325 = arith.addf %324, %9 : vector<4x128xf32>
    %326 = math.tanh %325 : vector<4x128xf32>
    %327 = vector.extract_strided_slice %326 {offsets = [0, 0], sizes = [4, 32], strides = [1, 1]} : vector<4x128xf32> to vector<4x32xf32>
    %cst_120 = arith.constant 5.000000e-01 : f32
    %328 = vector.broadcast %cst_120 : f32 to vector<4x32xf32>
    %329 = arith.mulf %328, %327 : vector<4x32xf32>
    %cst_121 = arith.constant 5.000000e-01 : f32
    %330 = vector.broadcast %cst_121 : f32 to vector<4x32xf32>
    %331 = arith.addf %329, %330 : vector<4x32xf32>
    %332 = vector.extract_strided_slice %326 {offsets = [0, 32], sizes = [4, 32], strides = [1, 1]} : vector<4x128xf32> to vector<4x32xf32>
    %cst_122 = arith.constant 5.000000e-01 : f32
    %333 = vector.broadcast %cst_122 : f32 to vector<4x32xf32>
    %334 = arith.mulf %333, %332 : vector<4x32xf32>
    %cst_123 = arith.constant 5.000000e-01 : f32
    %335 = vector.broadcast %cst_123 : f32 to vector<4x32xf32>
    %336 = arith.addf %334, %335 : vector<4x32xf32>
    %337 = vector.extract_strided_slice %326 {offsets = [0, 64], sizes = [4, 32], strides = [1, 1]} : vector<4x128xf32> to vector<4x32xf32>
    %cst_124 = arith.constant 5.000000e-01 : f32
    %338 = vector.broadcast %cst_124 : f32 to vector<4x32xf32>
    %339 = arith.mulf %338, %337 : vector<4x32xf32>
    %cst_125 = arith.constant 5.000000e-01 : f32
    %340 = vector.broadcast %cst_125 : f32 to vector<4x32xf32>
    %341 = arith.addf %339, %340 : vector<4x32xf32>
    %342 = vector.extract_strided_slice %326 {offsets = [0, 96], sizes = [4, 32], strides = [1, 1]} : vector<4x128xf32> to vector<4x32xf32>
    %343 = arith.mulf %336, %278 : vector<4x32xf32>
    %344 = arith.mulf %331, %342 : vector<4x32xf32>
    %345 = arith.addf %343, %344 : vector<4x32xf32>
    %346 = math.tanh %345 : vector<4x32xf32>
    %347 = arith.mulf %341, %346 : vector<4x32xf32>
    %348 = arith.truncf %347 : vector<4x32xf32> to vector<4x32xbf16>
    %349 = arith.mulf %347, %12 : vector<4x32xf32>
    %cst_126 = arith.constant dense<0.000000e+00> : vector<4xf32>
    %350 = vector.multi_reduction <add>, %349, %cst_126 [1] : vector<4x32xf32> to vector<4xf32>
    %351 = vector.shape_cast %350 : vector<4xf32> to vector<4x1xf32>
    %352 = arith.addf %351, %15 : vector<4x1xf32>
    %cst_127 = arith.constant 5.000000e-01 : f32
    %353 = vector.broadcast %cst_127 : f32 to vector<4x1xf32>
    %354 = arith.mulf %353, %352 : vector<4x1xf32>
    %355 = math.tanh %354 : vector<4x1xf32>
    %cst_128 = arith.constant 5.000000e-01 : f32
    %356 = vector.broadcast %cst_128 : f32 to vector<4x1xf32>
    %357 = arith.mulf %356, %355 : vector<4x1xf32>
    %cst_129 = arith.constant 5.000000e-01 : f32
    %358 = vector.broadcast %cst_129 : f32 to vector<4x1xf32>
    %359 = arith.addf %357, %358 : vector<4x1xf32>
    %c4 = arith.constant 4 : index
    %c0_130 = arith.constant 0 : index
    %c0_131 = arith.constant 0 : index
    %360 = vector.load %arg8[%c4, %c0_130, %c0_131] : memref<8x4x1xf32, #tpu.memory_space<vmem>>, vector<1x4x1xf32>
    %361 = vector.shape_cast %360 : vector<1x4x1xf32> to vector<4x1xf32>
    %362 = vector.shape_cast %359 : vector<4x1xf32> to vector<1x4x1xf32>
    tpu.vector_store %arg8[%c4, %c0_130, %c0_131], %362 {strides = array<i32>} : memref<8x4x1xf32, #tpu.memory_space<vmem>>, vector<1x4x1xf32>,
    %363 = vector.extract_strided_slice %23 {offsets = [20, 0], sizes = [4, 128], strides = [1, 1]} : vector<32x128xf32> to vector<4x128xf32>
    %cst_132 = arith.constant dense<0.000000e+00> : vector<4x128xf32>
    %364 = tpu.matmul %321, %1, %cst_132 {dimension_numbers = #tpu.dot_dimension_numbers<[1], [0], [0], [1], [0, 0, 1, 1], [], []>} : vector<4x32xbf16>, vector<32x128xbf16>, vector<4x128xf32> -> vector<4x128xf32>
    %365 = arith.addf %363, %364 : vector<4x128xf32>
    %366 = math.tanh %365 : vector<4x128xf32>
    %367 = vector.extract_strided_slice %366 {offsets = [0, 0], sizes = [4, 32], strides = [1, 1]} : vector<4x128xf32> to vector<4x32xf32>
    %cst_133 = arith.constant 5.000000e-01 : f32
    %368 = vector.broadcast %cst_133 : f32 to vector<4x32xf32>
    %369 = arith.mulf %368, %367 : vector<4x32xf32>
    %cst_134 = arith.constant 5.000000e-01 : f32
    %370 = vector.broadcast %cst_134 : f32 to vector<4x32xf32>
    %371 = arith.addf %369, %370 : vector<4x32xf32>
    %372 = vector.extract_strided_slice %366 {offsets = [0, 32], sizes = [4, 32], strides = [1, 1]} : vector<4x128xf32> to vector<4x32xf32>
    %cst_135 = arith.constant 5.000000e-01 : f32
    %373 = vector.broadcast %cst_135 : f32 to vector<4x32xf32>
    %374 = arith.mulf %373, %372 : vector<4x32xf32>
    %cst_136 = arith.constant 5.000000e-01 : f32
    %375 = vector.broadcast %cst_136 : f32 to vector<4x32xf32>
    %376 = arith.addf %374, %375 : vector<4x32xf32>
    %377 = vector.extract_strided_slice %366 {offsets = [0, 64], sizes = [4, 32], strides = [1, 1]} : vector<4x128xf32> to vector<4x32xf32>
    %cst_137 = arith.constant 5.000000e-01 : f32
    %378 = vector.broadcast %cst_137 : f32 to vector<4x32xf32>
    %379 = arith.mulf %378, %377 : vector<4x32xf32>
    %cst_138 = arith.constant 5.000000e-01 : f32
    %380 = vector.broadcast %cst_138 : f32 to vector<4x32xf32>
    %381 = arith.addf %379, %380 : vector<4x32xf32>
    %382 = vector.extract_strided_slice %366 {offsets = [0, 96], sizes = [4, 32], strides = [1, 1]} : vector<4x128xf32> to vector<4x32xf32>
    %383 = arith.mulf %376, %318 : vector<4x32xf32>
    %384 = arith.mulf %371, %382 : vector<4x32xf32>
    %385 = arith.addf %383, %384 : vector<4x32xf32>
    %386 = math.tanh %385 : vector<4x32xf32>
    %387 = arith.mulf %381, %386 : vector<4x32xf32>
    %388 = arith.truncf %387 : vector<4x32xf32> to vector<4x32xbf16>
    %cst_139 = arith.constant dense<0.000000e+00> : vector<4x128xf32>
    %389 = tpu.matmul %388, %5, %cst_139 {dimension_numbers = #tpu.dot_dimension_numbers<[1], [0], [0], [1], [0, 0, 1, 1], [], []>} : vector<4x32xbf16>, vector<32x128xbf16>, vector<4x128xf32> -> vector<4x128xf32>
    %cst_140 = arith.constant dense<0.000000e+00> : vector<4x128xf32>
    %390 = tpu.matmul %348, %3, %cst_140 {dimension_numbers = #tpu.dot_dimension_numbers<[1], [0], [0], [1], [0, 0, 1, 1], [], []>} : vector<4x32xbf16>, vector<32x128xbf16>, vector<4x128xf32> -> vector<4x128xf32>
    %391 = arith.addf %389, %390 : vector<4x128xf32>
    %392 = arith.addf %391, %9 : vector<4x128xf32>
    %393 = math.tanh %392 : vector<4x128xf32>
    %394 = vector.extract_strided_slice %393 {offsets = [0, 0], sizes = [4, 32], strides = [1, 1]} : vector<4x128xf32> to vector<4x32xf32>
    %cst_141 = arith.constant 5.000000e-01 : f32
    %395 = vector.broadcast %cst_141 : f32 to vector<4x32xf32>
    %396 = arith.mulf %395, %394 : vector<4x32xf32>
    %cst_142 = arith.constant 5.000000e-01 : f32
    %397 = vector.broadcast %cst_142 : f32 to vector<4x32xf32>
    %398 = arith.addf %396, %397 : vector<4x32xf32>
    %399 = vector.extract_strided_slice %393 {offsets = [0, 32], sizes = [4, 32], strides = [1, 1]} : vector<4x128xf32> to vector<4x32xf32>
    %cst_143 = arith.constant 5.000000e-01 : f32
    %400 = vector.broadcast %cst_143 : f32 to vector<4x32xf32>
    %401 = arith.mulf %400, %399 : vector<4x32xf32>
    %cst_144 = arith.constant 5.000000e-01 : f32
    %402 = vector.broadcast %cst_144 : f32 to vector<4x32xf32>
    %403 = arith.addf %401, %402 : vector<4x32xf32>
    %404 = vector.extract_strided_slice %393 {offsets = [0, 64], sizes = [4, 32], strides = [1, 1]} : vector<4x128xf32> to vector<4x32xf32>
    %cst_145 = arith.constant 5.000000e-01 : f32
    %405 = vector.broadcast %cst_145 : f32 to vector<4x32xf32>
    %406 = arith.mulf %405, %404 : vector<4x32xf32>
    %cst_146 = arith.constant 5.000000e-01 : f32
    %407 = vector.broadcast %cst_146 : f32 to vector<4x32xf32>
    %408 = arith.addf %406, %407 : vector<4x32xf32>
    %409 = vector.extract_strided_slice %393 {offsets = [0, 96], sizes = [4, 32], strides = [1, 1]} : vector<4x128xf32> to vector<4x32xf32>
    %410 = arith.mulf %403, %345 : vector<4x32xf32>
    %411 = arith.mulf %398, %409 : vector<4x32xf32>
    %412 = arith.addf %410, %411 : vector<4x32xf32>
    %413 = math.tanh %412 : vector<4x32xf32>
    %414 = arith.mulf %408, %413 : vector<4x32xf32>
    %415 = arith.truncf %414 : vector<4x32xf32> to vector<4x32xbf16>
    %416 = arith.mulf %414, %12 : vector<4x32xf32>
    %cst_147 = arith.constant dense<0.000000e+00> : vector<4xf32>
    %417 = vector.multi_reduction <add>, %416, %cst_147 [1] : vector<4x32xf32> to vector<4xf32>
    %418 = vector.shape_cast %417 : vector<4xf32> to vector<4x1xf32>
    %419 = arith.addf %418, %15 : vector<4x1xf32>
    %cst_148 = arith.constant 5.000000e-01 : f32
    %420 = vector.broadcast %cst_148 : f32 to vector<4x1xf32>
    %421 = arith.mulf %420, %419 : vector<4x1xf32>
    %422 = math.tanh %421 : vector<4x1xf32>
    %cst_149 = arith.constant 5.000000e-01 : f32
    %423 = vector.broadcast %cst_149 : f32 to vector<4x1xf32>
    %424 = arith.mulf %423, %422 : vector<4x1xf32>
    %cst_150 = arith.constant 5.000000e-01 : f32
    %425 = vector.broadcast %cst_150 : f32 to vector<4x1xf32>
    %426 = arith.addf %424, %425 : vector<4x1xf32>
    %c5 = arith.constant 5 : index
    %c0_151 = arith.constant 0 : index
    %c0_152 = arith.constant 0 : index
    %427 = vector.load %arg8[%c5, %c0_151, %c0_152] : memref<8x4x1xf32, #tpu.memory_space<vmem>>, vector<1x4x1xf32>
    %428 = vector.shape_cast %427 : vector<1x4x1xf32> to vector<4x1xf32>
    %429 = vector.shape_cast %426 : vector<4x1xf32> to vector<1x4x1xf32>
    tpu.vector_store %arg8[%c5, %c0_151, %c0_152], %429 {strides = array<i32>} : memref<8x4x1xf32, #tpu.memory_space<vmem>>, vector<1x4x1xf32>,
    %430 = vector.extract_strided_slice %23 {offsets = [24, 0], sizes = [4, 128], strides = [1, 1]} : vector<32x128xf32> to vector<4x128xf32>
    %cst_153 = arith.constant dense<0.000000e+00> : vector<4x128xf32>
    %431 = tpu.matmul %388, %1, %cst_153 {dimension_numbers = #tpu.dot_dimension_numbers<[1], [0], [0], [1], [0, 0, 1, 1], [], []>} : vector<4x32xbf16>, vector<32x128xbf16>, vector<4x128xf32> -> vector<4x128xf32>
    %432 = arith.addf %430, %431 : vector<4x128xf32>
    %433 = math.tanh %432 : vector<4x128xf32>
    %434 = vector.extract_strided_slice %433 {offsets = [0, 0], sizes = [4, 32], strides = [1, 1]} : vector<4x128xf32> to vector<4x32xf32>
    %cst_154 = arith.constant 5.000000e-01 : f32
    %435 = vector.broadcast %cst_154 : f32 to vector<4x32xf32>
    %436 = arith.mulf %435, %434 : vector<4x32xf32>
    %cst_155 = arith.constant 5.000000e-01 : f32
    %437 = vector.broadcast %cst_155 : f32 to vector<4x32xf32>
    %438 = arith.addf %436, %437 : vector<4x32xf32>
    %439 = vector.extract_strided_slice %433 {offsets = [0, 32], sizes = [4, 32], strides = [1, 1]} : vector<4x128xf32> to vector<4x32xf32>
    %cst_156 = arith.constant 5.000000e-01 : f32
    %440 = vector.broadcast %cst_156 : f32 to vector<4x32xf32>
    %441 = arith.mulf %440, %439 : vector<4x32xf32>
    %cst_157 = arith.constant 5.000000e-01 : f32
    %442 = vector.broadcast %cst_157 : f32 to vector<4x32xf32>
    %443 = arith.addf %441, %442 : vector<4x32xf32>
    %444 = vector.extract_strided_slice %433 {offsets = [0, 64], sizes = [4, 32], strides = [1, 1]} : vector<4x128xf32> to vector<4x32xf32>
    %cst_158 = arith.constant 5.000000e-01 : f32
    %445 = vector.broadcast %cst_158 : f32 to vector<4x32xf32>
    %446 = arith.mulf %445, %444 : vector<4x32xf32>
    %cst_159 = arith.constant 5.000000e-01 : f32
    %447 = vector.broadcast %cst_159 : f32 to vector<4x32xf32>
    %448 = arith.addf %446, %447 : vector<4x32xf32>
    %449 = vector.extract_strided_slice %433 {offsets = [0, 96], sizes = [4, 32], strides = [1, 1]} : vector<4x128xf32> to vector<4x32xf32>
    %450 = arith.mulf %443, %385 : vector<4x32xf32>
    %451 = arith.mulf %438, %449 : vector<4x32xf32>
    %452 = arith.addf %450, %451 : vector<4x32xf32>
    %453 = math.tanh %452 : vector<4x32xf32>
    %454 = arith.mulf %448, %453 : vector<4x32xf32>
    %455 = arith.truncf %454 : vector<4x32xf32> to vector<4x32xbf16>
    %cst_160 = arith.constant dense<0.000000e+00> : vector<4x128xf32>
    %456 = tpu.matmul %455, %5, %cst_160 {dimension_numbers = #tpu.dot_dimension_numbers<[1], [0], [0], [1], [0, 0, 1, 1], [], []>} : vector<4x32xbf16>, vector<32x128xbf16>, vector<4x128xf32> -> vector<4x128xf32>
    %cst_161 = arith.constant dense<0.000000e+00> : vector<4x128xf32>
    %457 = tpu.matmul %415, %3, %cst_161 {dimension_numbers = #tpu.dot_dimension_numbers<[1], [0], [0], [1], [0, 0, 1, 1], [], []>} : vector<4x32xbf16>, vector<32x128xbf16>, vector<4x128xf32> -> vector<4x128xf32>
    %458 = arith.addf %456, %457 : vector<4x128xf32>
    %459 = arith.addf %458, %9 : vector<4x128xf32>
    %460 = math.tanh %459 : vector<4x128xf32>
    %461 = vector.extract_strided_slice %460 {offsets = [0, 0], sizes = [4, 32], strides = [1, 1]} : vector<4x128xf32> to vector<4x32xf32>
    %cst_162 = arith.constant 5.000000e-01 : f32
    %462 = vector.broadcast %cst_162 : f32 to vector<4x32xf32>
    %463 = arith.mulf %462, %461 : vector<4x32xf32>
    %cst_163 = arith.constant 5.000000e-01 : f32
    %464 = vector.broadcast %cst_163 : f32 to vector<4x32xf32>
    %465 = arith.addf %463, %464 : vector<4x32xf32>
    %466 = vector.extract_strided_slice %460 {offsets = [0, 32], sizes = [4, 32], strides = [1, 1]} : vector<4x128xf32> to vector<4x32xf32>
    %cst_164 = arith.constant 5.000000e-01 : f32
    %467 = vector.broadcast %cst_164 : f32 to vector<4x32xf32>
    %468 = arith.mulf %467, %466 : vector<4x32xf32>
    %cst_165 = arith.constant 5.000000e-01 : f32
    %469 = vector.broadcast %cst_165 : f32 to vector<4x32xf32>
    %470 = arith.addf %468, %469 : vector<4x32xf32>
    %471 = vector.extract_strided_slice %460 {offsets = [0, 64], sizes = [4, 32], strides = [1, 1]} : vector<4x128xf32> to vector<4x32xf32>
    %cst_166 = arith.constant 5.000000e-01 : f32
    %472 = vector.broadcast %cst_166 : f32 to vector<4x32xf32>
    %473 = arith.mulf %472, %471 : vector<4x32xf32>
    %cst_167 = arith.constant 5.000000e-01 : f32
    %474 = vector.broadcast %cst_167 : f32 to vector<4x32xf32>
    %475 = arith.addf %473, %474 : vector<4x32xf32>
    %476 = vector.extract_strided_slice %460 {offsets = [0, 96], sizes = [4, 32], strides = [1, 1]} : vector<4x128xf32> to vector<4x32xf32>
    %477 = arith.mulf %470, %412 : vector<4x32xf32>
    %478 = arith.mulf %465, %476 : vector<4x32xf32>
    %479 = arith.addf %477, %478 : vector<4x32xf32>
    %480 = math.tanh %479 : vector<4x32xf32>
    %481 = arith.mulf %475, %480 : vector<4x32xf32>
    %482 = arith.truncf %481 : vector<4x32xf32> to vector<4x32xbf16>
    %483 = arith.mulf %481, %12 : vector<4x32xf32>
    %cst_168 = arith.constant dense<0.000000e+00> : vector<4xf32>
    %484 = vector.multi_reduction <add>, %483, %cst_168 [1] : vector<4x32xf32> to vector<4xf32>
    %485 = vector.shape_cast %484 : vector<4xf32> to vector<4x1xf32>
    %486 = arith.addf %485, %15 : vector<4x1xf32>
    %cst_169 = arith.constant 5.000000e-01 : f32
    %487 = vector.broadcast %cst_169 : f32 to vector<4x1xf32>
    %488 = arith.mulf %487, %486 : vector<4x1xf32>
    %489 = math.tanh %488 : vector<4x1xf32>
    %cst_170 = arith.constant 5.000000e-01 : f32
    %490 = vector.broadcast %cst_170 : f32 to vector<4x1xf32>
    %491 = arith.mulf %490, %489 : vector<4x1xf32>
    %cst_171 = arith.constant 5.000000e-01 : f32
    %492 = vector.broadcast %cst_171 : f32 to vector<4x1xf32>
    %493 = arith.addf %491, %492 : vector<4x1xf32>
    %c6 = arith.constant 6 : index
    %c0_172 = arith.constant 0 : index
    %c0_173 = arith.constant 0 : index
    %494 = vector.load %arg8[%c6, %c0_172, %c0_173] : memref<8x4x1xf32, #tpu.memory_space<vmem>>, vector<1x4x1xf32>
    %495 = vector.shape_cast %494 : vector<1x4x1xf32> to vector<4x1xf32>
    %496 = vector.shape_cast %493 : vector<4x1xf32> to vector<1x4x1xf32>
    tpu.vector_store %arg8[%c6, %c0_172, %c0_173], %496 {strides = array<i32>} : memref<8x4x1xf32, #tpu.memory_space<vmem>>, vector<1x4x1xf32>,
    %497 = vector.extract_strided_slice %23 {offsets = [28, 0], sizes = [4, 128], strides = [1, 1]} : vector<32x128xf32> to vector<4x128xf32>
    %cst_174 = arith.constant dense<0.000000e+00> : vector<4x128xf32>
    %498 = tpu.matmul %455, %1, %cst_174 {dimension_numbers = #tpu.dot_dimension_numbers<[1], [0], [0], [1], [0, 0, 1, 1], [], []>} : vector<4x32xbf16>, vector<32x128xbf16>, vector<4x128xf32> -> vector<4x128xf32>
    %499 = arith.addf %497, %498 : vector<4x128xf32>
    %500 = math.tanh %499 : vector<4x128xf32>
    %501 = vector.extract_strided_slice %500 {offsets = [0, 0], sizes = [4, 32], strides = [1, 1]} : vector<4x128xf32> to vector<4x32xf32>
    %cst_175 = arith.constant 5.000000e-01 : f32
    %502 = vector.broadcast %cst_175 : f32 to vector<4x32xf32>
    %503 = arith.mulf %502, %501 : vector<4x32xf32>
    %cst_176 = arith.constant 5.000000e-01 : f32
    %504 = vector.broadcast %cst_176 : f32 to vector<4x32xf32>
    %505 = arith.addf %503, %504 : vector<4x32xf32>
    %506 = vector.extract_strided_slice %500 {offsets = [0, 32], sizes = [4, 32], strides = [1, 1]} : vector<4x128xf32> to vector<4x32xf32>
    %cst_177 = arith.constant 5.000000e-01 : f32
    %507 = vector.broadcast %cst_177 : f32 to vector<4x32xf32>
    %508 = arith.mulf %507, %506 : vector<4x32xf32>
    %cst_178 = arith.constant 5.000000e-01 : f32
    %509 = vector.broadcast %cst_178 : f32 to vector<4x32xf32>
    %510 = arith.addf %508, %509 : vector<4x32xf32>
    %511 = vector.extract_strided_slice %500 {offsets = [0, 64], sizes = [4, 32], strides = [1, 1]} : vector<4x128xf32> to vector<4x32xf32>
    %cst_179 = arith.constant 5.000000e-01 : f32
    %512 = vector.broadcast %cst_179 : f32 to vector<4x32xf32>
    %513 = arith.mulf %512, %511 : vector<4x32xf32>
    %cst_180 = arith.constant 5.000000e-01 : f32
    %514 = vector.broadcast %cst_180 : f32 to vector<4x32xf32>
    %515 = arith.addf %513, %514 : vector<4x32xf32>
    %516 = vector.extract_strided_slice %500 {offsets = [0, 96], sizes = [4, 32], strides = [1, 1]} : vector<4x128xf32> to vector<4x32xf32>
    %517 = arith.mulf %510, %452 : vector<4x32xf32>
    %518 = arith.mulf %505, %516 : vector<4x32xf32>
    %519 = arith.addf %517, %518 : vector<4x32xf32>
    %520 = math.tanh %519 : vector<4x32xf32>
    %521 = arith.mulf %515, %520 : vector<4x32xf32>
    %522 = arith.truncf %521 : vector<4x32xf32> to vector<4x32xbf16>
    %cst_181 = arith.constant dense<0.000000e+00> : vector<4x128xf32>
    %523 = tpu.matmul %522, %5, %cst_181 {dimension_numbers = #tpu.dot_dimension_numbers<[1], [0], [0], [1], [0, 0, 1, 1], [], []>} : vector<4x32xbf16>, vector<32x128xbf16>, vector<4x128xf32> -> vector<4x128xf32>
    %cst_182 = arith.constant dense<0.000000e+00> : vector<4x128xf32>
    %524 = tpu.matmul %482, %3, %cst_182 {dimension_numbers = #tpu.dot_dimension_numbers<[1], [0], [0], [1], [0, 0, 1, 1], [], []>} : vector<4x32xbf16>, vector<32x128xbf16>, vector<4x128xf32> -> vector<4x128xf32>
    %525 = arith.addf %523, %524 : vector<4x128xf32>
    %526 = arith.addf %525, %9 : vector<4x128xf32>
    %527 = math.tanh %526 : vector<4x128xf32>
    %528 = vector.extract_strided_slice %527 {offsets = [0, 0], sizes = [4, 32], strides = [1, 1]} : vector<4x128xf32> to vector<4x32xf32>
    %cst_183 = arith.constant 5.000000e-01 : f32
    %529 = vector.broadcast %cst_183 : f32 to vector<4x32xf32>
    %530 = arith.mulf %529, %528 : vector<4x32xf32>
    %cst_184 = arith.constant 5.000000e-01 : f32
    %531 = vector.broadcast %cst_184 : f32 to vector<4x32xf32>
    %532 = arith.addf %530, %531 : vector<4x32xf32>
    %533 = vector.extract_strided_slice %527 {offsets = [0, 32], sizes = [4, 32], strides = [1, 1]} : vector<4x128xf32> to vector<4x32xf32>
    %cst_185 = arith.constant 5.000000e-01 : f32
    %534 = vector.broadcast %cst_185 : f32 to vector<4x32xf32>
    %535 = arith.mulf %534, %533 : vector<4x32xf32>
    %cst_186 = arith.constant 5.000000e-01 : f32
    %536 = vector.broadcast %cst_186 : f32 to vector<4x32xf32>
    %537 = arith.addf %535, %536 : vector<4x32xf32>
    %538 = vector.extract_strided_slice %527 {offsets = [0, 64], sizes = [4, 32], strides = [1, 1]} : vector<4x128xf32> to vector<4x32xf32>
    %cst_187 = arith.constant 5.000000e-01 : f32
    %539 = vector.broadcast %cst_187 : f32 to vector<4x32xf32>
    %540 = arith.mulf %539, %538 : vector<4x32xf32>
    %cst_188 = arith.constant 5.000000e-01 : f32
    %541 = vector.broadcast %cst_188 : f32 to vector<4x32xf32>
    %542 = arith.addf %540, %541 : vector<4x32xf32>
    %543 = vector.extract_strided_slice %527 {offsets = [0, 96], sizes = [4, 32], strides = [1, 1]} : vector<4x128xf32> to vector<4x32xf32>
    %544 = arith.mulf %537, %479 : vector<4x32xf32>
    %545 = arith.mulf %532, %543 : vector<4x32xf32>
    %546 = arith.addf %544, %545 : vector<4x32xf32>
    %547 = math.tanh %546 : vector<4x32xf32>
    %548 = arith.mulf %542, %547 : vector<4x32xf32>
    %549 = arith.mulf %548, %12 : vector<4x32xf32>
    %cst_189 = arith.constant dense<0.000000e+00> : vector<4xf32>
    %550 = vector.multi_reduction <add>, %549, %cst_189 [1] : vector<4x32xf32> to vector<4xf32>
    %551 = vector.shape_cast %550 : vector<4xf32> to vector<4x1xf32>
    %552 = arith.addf %551, %15 : vector<4x1xf32>
    %cst_190 = arith.constant 5.000000e-01 : f32
    %553 = vector.broadcast %cst_190 : f32 to vector<4x1xf32>
    %554 = arith.mulf %553, %552 : vector<4x1xf32>
    %555 = math.tanh %554 : vector<4x1xf32>
    %cst_191 = arith.constant 5.000000e-01 : f32
    %556 = vector.broadcast %cst_191 : f32 to vector<4x1xf32>
    %557 = arith.mulf %556, %555 : vector<4x1xf32>
    %cst_192 = arith.constant 5.000000e-01 : f32
    %558 = vector.broadcast %cst_192 : f32 to vector<4x1xf32>
    %559 = arith.addf %557, %558 : vector<4x1xf32>
    %c7 = arith.constant 7 : index
    %c0_193 = arith.constant 0 : index
    %c0_194 = arith.constant 0 : index
    %560 = vector.load %arg8[%c7, %c0_193, %c0_194] : memref<8x4x1xf32, #tpu.memory_space<vmem>>, vector<1x4x1xf32>
    %561 = vector.shape_cast %560 : vector<1x4x1xf32> to vector<4x1xf32>
    %562 = vector.shape_cast %559 : vector<4x1xf32> to vector<1x4x1xf32>
    tpu.vector_store %arg8[%c7, %c0_193, %c0_194], %562 {strides = array<i32>} : memref<8x4x1xf32, #tpu.memory_space<vmem>>, vector<1x4x1xf32>,
    return
  }
  func.func @transform_0(%arg0: i32) -> (i32, i32) {
    %c0_i32 = arith.constant 0 : i32
    %c0_i32_0 = arith.constant 0 : i32
    %c0_i32_1 = arith.constant 0 : i32
    return %c0_i32, %c0_i32_0 : i32, i32
  }
  func.func @transform_1(%arg0: i32) -> (i32, i32) {
    %c0_i32 = arith.constant 0 : i32
    %c0_i32_0 = arith.constant 0 : i32
    %c0_i32_1 = arith.constant 0 : i32
    return %c0_i32, %c0_i32_0 : i32, i32
  }
  func.func @transform_2(%arg0: i32) -> (i32, i32, i32) {
    %c0_i32 = arith.constant 0 : i32
    %c0_i32_0 = arith.constant 0 : i32
    %c0_i32_1 = arith.constant 0 : i32
    %c0_i32_2 = arith.constant 0 : i32
    return %c0_i32, %c0_i32_0, %c0_i32_1 : i32, i32, i32
  }
  func.func @transform_3(%arg0: i32) -> (i32, i32, i32) {
    %c0_i32 = arith.constant 0 : i32
    %c0_i32_0 = arith.constant 0 : i32
    %c0_i32_1 = arith.constant 0 : i32
    %c0_i32_2 = arith.constant 0 : i32
    return %c0_i32, %c0_i32_0, %c0_i32_1 : i32, i32, i32
  }
  func.func @transform_4(%arg0: i32) -> (i32, i32, i32) {
    %c0_i32 = arith.constant 0 : i32
    %c0_i32_0 = arith.constant 0 : i32
    %c0_i32_1 = arith.constant 0 : i32
    %c0_i32_2 = arith.constant 0 : i32
    return %c0_i32, %c0_i32_0, %c0_i32_1 : i32, i32, i32
  }
  func.func @transform_5(%arg0: i32) -> (i32, i32) {
    %c0_i32 = arith.constant 0 : i32
    %c0_i32_0 = arith.constant 0 : i32
    %c0_i32_1 = arith.constant 0 : i32
    return %c0_i32, %c0_i32_0 : i32, i32
  }
  func.func @transform_6(%arg0: i32) -> (i32, i32) {
    %c0_i32 = arith.constant 0 : i32
    %c0_i32_0 = arith.constant 0 : i32
    %c0_i32_1 = arith.constant 0 : i32
    return %c0_i32, %c0_i32_0 : i32, i32
  }
  func.func @transform_7(%arg0: i32) -> (i32, i32, i32) {
    %c0_i32 = arith.constant 0 : i32
    %c0_i32_0 = arith.constant 0 : i32
    %c0_i32_1 = arith.constant 0 : i32
    %c0_i32_2 = arith.constant 0 : i32
    return %c0_i32, %c0_i32_0, %c0_i32_1 : i32, i32, i32
  }
}

</mosaic_0001>

<llo_original>
// kernel: tpu_custom_call.1
$region0: #{tpu_custom_call.1}
  #allocation0 [shape = 'u32[]', space=smem, size = 0x4, offset = 0x4, fixed_abs, tag = 'smem constant byte address 0x4 - core index']
  #allocation1 [shape = 'u32[144,128]{1,0:T(1,128)}', space=vmem, size = 0x12000, scoped, tag = 'internal scratch']
  #allocation2 [shape = 'f32[1,1]{1,0:T(1,128)S(1)}', space=vmem, size = 0x200, scoped, tag = 'scoped memory for tpu_custom_call.1']
  %s0 = inlined_call_operand.vmem [shape: bf16[32,8], index: 0, kind: input, shape index: {}]
  %s1 = inlined_call_operand.vmem [shape: bf16[8,128], index: 1, kind: input, shape index: {}]
  %s2 = inlined_call_operand.hbm [shape: bf16[2,32,128], index: 2, kind: input, shape index: {}]
  %s3 = inlined_call_operand.vmem [shape: bf16[1,32,128], index: 3, kind: input, shape index: {}]
  %s4 = inlined_call_operand.vmem [shape: f32[2,1,128], index: 4, kind: input, shape index: {}]
  %s5 = inlined_call_operand.vmem [shape: f32[1,32], index: 5, kind: input, shape index: {}]
  %s6 = inlined_call_operand.<no memory space> [shape: f32[1,1], index: 6, kind: input, shape index: {}]
  %s7 = inlined_call_operand.vmem [shape: f32[8,4,1], index: 7, kind: output, shape index: {}]
  %s8 = sld [smem:[#allocation0]]
  $region42: #{tpu_custom_call.1} parent=0
    _
  %s10 = ssub.s32 1, %s8
  %s11 = scalar_select 0, %s10, %s8
  %v12 = vstv %s6
  %13 = vst [vmem:[#allocation2] sm:$0x1] %v12
  $region1: #{tpu_custom_call.1} parent=0
    #allocation3 [shape = 'u8[16384]{0}', space=vmem, size = 0x4000, scoped, tag = 'input window, operand 2, single buffered']
    #allocation4 [shape = 's32[1]{0}', space=sflag, size = 0x4, scoped, tag = 'scoped memory for tpu_custom_call.1']
    %14 = vsyncpa [#allocation4], 0
    // Predicated region
    $region2: #{tpu_custom_call.1} parent=1 // pred_check
      _
    $region3: #{tpu_custom_call.1} parent=1 // pred_check_branch
      %16 = sbr.rel (0) target = $region5
    $region4: #{tpu_custom_call.1} parent=1 // pred_region
      _
    $region5: #{tpu_custom_call.1} parent=1 // pred_fallthru
      _
    // Predicated region
    $region6: #{tpu_custom_call.1} parent=1 // pred_check
      _
    $region7: #{tpu_custom_call.1} parent=1 // pred_check_branch
      %18 = sbr.rel (0) target = $region9
    $region8: #{tpu_custom_call.1} parent=1 // pred_region
      _
    $region9: #{tpu_custom_call.1} parent=1 // pred_fallthru
      _
    // Predicated region
    $region10: #{tpu_custom_call.1} parent=1 // pred_check
      _
    $region11: #{tpu_custom_call.1} parent=1 // pred_check_branch
      %20 = sbr.rel (0) target = $region13
    $region12: #{tpu_custom_call.1} parent=1 // pred_region
      %s22 = ssub.s32 512, 512
      %23 = vsyncadd [#allocation4], %s22
      %s24 = sshll.u32 [#allocation3], 4
      %s25 = int_to_ptr.vmem [resolvable:$true] %s24
      %30 = dma.hbm_to_vmem [thread:$0]  %s2, 512, %s25, [#allocation4], 64, 64, 4
    $region13: #{tpu_custom_call.1} parent=1 // pred_fallthru
      _
    // Predicated region
    $region14: #{tpu_custom_call.1} parent=1 // pred_check
      _
    $region15: #{tpu_custom_call.1} parent=1 // pred_check_branch
      %32 = sbr.rel (0) target = $region17
    $region16: #{tpu_custom_call.1} parent=1 // pred_region
      _
    $region17: #{tpu_custom_call.1} parent=1 // pred_fallthru
      _
    // Predicated region
    $region18: #{tpu_custom_call.1} parent=1 // pred_check
      _
    $region19: #{tpu_custom_call.1} parent=1 // pred_check_branch
      %34 = sbr.rel (0) target = $region21
    $region20: #{tpu_custom_call.1} parent=1 // pred_region
      _
    $region21: #{tpu_custom_call.1} parent=1 // pred_fallthru
      _
    // Predicated region
    $region22: #{tpu_custom_call.1} parent=1 // pred_check
      _
    $region23: #{tpu_custom_call.1} parent=1 // pred_check_branch
      %36 = sbr.rel (0) target = $region25
    $region24: #{tpu_custom_call.1} parent=1 // pred_region
      _
    $region25: #{tpu_custom_call.1} parent=1 // pred_fallthru
      _
    // Predicated region
    $region26: #{tpu_custom_call.1} parent=1 // pred_check
      _
    $region27: #{tpu_custom_call.1} parent=1 // pred_check_branch
      %38 = sbr.rel (0) target = $region29
    $region28: #{tpu_custom_call.1} parent=1 // pred_region
      _
    $region29: #{tpu_custom_call.1} parent=1 // pred_fallthru
      _
    // Predicated region
    $region30: #{tpu_custom_call.1} parent=1 // pred_check
      _
    $region31: #{tpu_custom_call.1} parent=1 // pred_check_branch
      %40 = sbr.rel (0) target = $region33
    $region32: #{tpu_custom_call.1} parent=1 // pred_region
      %41 = dma.done [#allocation4], 512
    $region33: #{tpu_custom_call.1} parent=1 // pred_fallthru
      _
    %v43 = vld [vmem:[#allocation3] sm:$0xf]
    %v44 = vld [vmem:[#allocation3 + $0x4] sm:$0xf]
    %v45 = vld [vmem:[#allocation3 + $0x8] sm:$0xf]
    %v46 = vld [vmem:[#allocation3 + $0xc] sm:$0xf]
    %s47 = scalar_lea.vmem [#allocation3], 16
    %v48 = vld [vmem:[%s47] sm:$0xf]
    %v49 = vld [vmem:[%s47 + $0x4] sm:$0xf]
    %v50 = vld [vmem:[%s47 + $0x8] sm:$0xf]
    %v51 = vld [vmem:[%s47 + $0xc] sm:$0xf]
    %v52 = vld [vmem:[%s3] sm:$0xf]
    %v53 = vld [vmem:[%s3 + $0x4] sm:$0xf]
    %v54 = vld [vmem:[%s3 + $0x8] sm:$0xf]
    %v55 = vld [vmem:[%s3 + $0xc] sm:$0xf]
    %s56 = scalar_lea.vmem %s4, 1
    %v57 = vld [vmem:[%s56] sm:$0x1]
    %v59 = vlaneseq
    %v60 = vshrl.u32 %v59, 7
    %v61 = vsub.s32 0, %v60
    %v62 = vrot.slane %v57, %v61
    %v64 = vld [vmem:[%s5] sm:$0x1]
    %v66 = vlaneseq
    %v67 = vshrl.u32 %v66, 7
    %v68 = vsub.s32 0, %v67
    %v69 = vrot.slane %v64, %v68
    %v70 = vld [vmem:[#allocation2] sm:$0x1]
    %v72 = vlaneseq
    %v73 = vshrl.u32 %v72, 7
    %v74 = vsub.s32 0, %v73
    %v75 = vrot.slane %v70, %v74
    %v77 = vld [vmem:[%s0] sm:$0xf]
    %v78 = vld [vmem:[%s0 + $0x4] sm:$0xf]
    %v79 = vld [vmem:[%s0 + $0x8] sm:$0xf]
    %v80 = vld [vmem:[%s0 + $0xc] sm:$0xf]
    %v81 = vld [vmem:[%s1] sm:$0xf]
    %v82 = vld [vmem:[%s4] sm:$0x1]
    %v84 = vlaneseq
    %v85 = vshrl.u32 %v84, 7
    %v86 = vsub.s32 0, %v85
    %v87 = vrot.slane %v82, %v86
    %v93 = vunpack.c.l.b16 %v77
    %v94 = vunpack.c.l.b16 %v78
    %v95 = vunpack.c.l.b16 %v79
    %v96 = vunpack.c.l.b16 %v80
    %v97 = vpack.c.b16 %v94, %v93
    %v98 = vpack.c.b16 %v96, %v95
    %vm99 = vcmask 64512
    %v101 = vsel %vm99, %v97, 0
    %v104 = vsel %vm99, %v98, 0
    %vm106 = vcmask 1043456
    %v108 = vsel %vm106, %v81, 0
    %110 = vmatprep.subr.bf16.mxu0 0
    %111 = vmatpush1.bf16.msra.mxu0 %v108
    %112 = vmatprep.subr.bf16.mxu0 0
    %113 = vmatpush1.bf16.msra.mxu0 0
    %114 = vmatprep.subr.bf16.mxu0 0
    %115 = vmatpush1.bf16.msra.mxu0 0
    %116 = vmatprep.subr.bf16.mxu0 0
    %117 = vmatpush1.bf16.msra.mxu0 0
    %118 = vmatprep.subr.bf16.mxu0 0
    %119 = vmatpush1.bf16.msra.mxu0 0
    %120 = vmatprep.subr.bf16.mxu0 0
    %121 = vmatpush1.bf16.msra.mxu0 0
    %122 = vmatprep.subr.bf16.mxu0 0
    %123 = vmatpush1.bf16.msra.mxu0 0
    %124 = vmatprep.subr.bf16.mxu0 0
    %125 = vmatpush1.bf16.msra.mxu0 0
    %126 = vmatprep.subr.bf16.mxu0 0
    %127 = vmatpush1.bf16.msra.mxu0 0
    %128 = vmatprep.subr.bf16.mxu0 0
    %129 = vmatpush1.bf16.msra.mxu0 0
    %130 = vmatprep.subr.bf16.mxu0 0
    %131 = vmatpush1.bf16.msra.mxu0 0
    %132 = vmatprep.subr.bf16.mxu0 0
    %133 = vmatpush1.bf16.msra.mxu0 0
    %134 = vmatprep.subr.bf16.mxu0 0
    %135 = vmatpush1.bf16.msra.mxu0 0
    %136 = vmatprep.subr.bf16.mxu0 0
    %137 = vmatpush1.bf16.msra.mxu0 0
    %138 = vmatprep.subr.bf16.mxu0 0
    %139 = vmatpush1.bf16.msra.mxu0 0
    %140 = vmatprep.subr.bf16.mxu0 0
    %141 = vmatpush1.bf16.msra.mxu0 0
    %142 = vmatprep.mubr.bf16.mxu0 0
    %143 = vmatmul.mubr.bf16.gmra.mrb[0].mxu0 %v101
    %v144 = vpop.f32.mrb[0].mxu0
    %v145 = vadd.f32 %v87, %v144
    %v146 = vpop.f32.mrb[0].mxu0
    %v147 = vpop.f32.mrb[0].mxu0
    %v148 = vadd.f32 %v87, %v147
    %v149 = vpop.f32.mrb[0].mxu0
    %150 = vmatprep.mubr.bf16.mxu0 0
    %151 = vmatmul.mubr.bf16.gmra.mrb[0].mxu0 %v104
    %v152 = vpop.f32.mrb[0].mxu0
    %v153 = vadd.f32 %v87, %v152
    %v154 = vpop.f32.mrb[0].mxu0
    %v155 = vpop.f32.mrb[0].mxu0
    %v156 = vadd.f32 %v87, %v155
    %v157 = vpop.f32.mrb[0].mxu0
    %158 = vdwg.mxu0
    %v163 = vunpack.c.l.b16 %v43
    %v164 = vunpack.c.l.b16 %v44
    %v165 = vunpack.c.l.b16 %v45
    %v166 = vunpack.c.l.b16 %v46
    %v167 = vpack.c.b16 %v164, %v163
    %v168 = vpack.c.b16 %v166, %v165
    %vm171 = vcmask 261120
    %v173 = vsel %vm171, 0, 0
    %175 = vmatprep.subr.bf16.mxu0 0
    %176 = vmatpush1.bf16.msra.mxu0 %v167
    %177 = vmatprep.subr.bf16.mxu0 0
    %178 = vmatpush1.bf16.msra.mxu0 %v168
    %179 = vmatprep.subr.bf16.mxu0 0
    %180 = vmatpush1.bf16.msra.mxu0 0
    %181 = vmatprep.subr.bf16.mxu0 0
    %182 = vmatpush1.bf16.msra.mxu0 0
    %183 = vmatprep.subr.bf16.mxu0 0
    %184 = vmatpush1.bf16.msra.mxu0 0
    %185 = vmatprep.subr.bf16.mxu0 0
    %186 = vmatpush1.bf16.msra.mxu0 0
    %187 = vmatprep.subr.bf16.mxu0 0
    %188 = vmatpush1.bf16.msra.mxu0 0
    %189 = vmatprep.subr.bf16.mxu0 0
    %190 = vmatpush1.bf16.msra.mxu0 0
    %191 = vmatprep.subr.bf16.mxu0 0
    %192 = vmatpush1.bf16.msra.mxu0 0
    %193 = vmatprep.subr.bf16.mxu0 0
    %194 = vmatpush1.bf16.msra.mxu0 0
    %195 = vmatprep.subr.bf16.mxu0 0
    %196 = vmatpush1.bf16.msra.mxu0 0
    %197 = vmatprep.subr.bf16.mxu0 0
    %198 = vmatpush1.bf16.msra.mxu0 0
    %199 = vmatprep.subr.bf16.mxu0 0
    %200 = vmatpush1.bf16.msra.mxu0 0
    %201 = vmatprep.subr.bf16.mxu0 0
    %202 = vmatpush1.bf16.msra.mxu0 0
    %203 = vmatprep.subr.bf16.mxu0 0
    %204 = vmatpush1.bf16.msra.mxu0 0
    %205 = vmatprep.subr.bf16.mxu0 0
    %206 = vmatpush1.bf16.msra.mxu0 0
    %207 = vmatprep.mubr.bf16.mxu0 0
    %208 = vmatmul.mubr.bf16.gmra.mrb[0].mxu0 %v173
    %v209 = vpop.f32.mrb[0].mxu0
    %v210 = vadd.f32 0.0, %v209
    %v211 = vpop.f32.mrb[0].mxu0
    %v212 = vpop.f32.mrb[0].mxu0
    %v213 = vpop.f32.mrb[0].mxu0
    %214 = vdwg.mxu0
    %v215 = vadd.f32 %v145, %v210
    %v216 = vtanh.pop %v215
    %v217 = vmul.f32 %v216, 0.5
    %v218 = vadd.f32 %v217, 0.5
    %v219 = vmul.f32 %v218, 0.0
    %221 = vrot.lane.b32.xlu0 %v216, 32
    %v222 = vpop.permute.xlu0 %221
    %v224 = vmul.f32 %v218, %v222
    %226 = vrot.lane.b32.xlu0 %v224, 32
    %v227 = vpop.permute.xlu0 %226
    %v229 = vadd.f32 %v219, %v227
    %v230 = vtanh.pop %v229
    %232 = vrot.lane.b32.xlu0 %v230, 32
    %v233 = vpop.permute.xlu0 %232
    %v235 = vmul.f32 %v218, %v233
    %v236 = vpack.c.bf16 %v235, %v235
    %v241 = vunpack.c.l.b16 %v48
    %v242 = vunpack.c.l.b16 %v49
    %v243 = vunpack.c.l.b16 %v50
    %v244 = vunpack.c.l.b16 %v51
    %v245 = vpack.c.b16 %v242, %v241
    %v246 = vpack.c.b16 %v244, %v243
    %249 = vmatprep.subr.bf16.mxu0 0
    %250 = vmatpush1.bf16.msra.mxu0 %v245
    %251 = vmatprep.subr.bf16.mxu0 0
    %252 = vmatpush1.bf16.msra.mxu0 %v246
    %253 = vmatprep.subr.bf16.mxu0 0
    %254 = vmatpush1.bf16.msra.mxu0 0
    %255 = vmatprep.subr.bf16.mxu0 0
    %256 = vmatpush1.bf16.msra.mxu0 0
    %257 = vmatprep.subr.bf16.mxu0 0
    %258 = vmatpush1.bf16.msra.mxu0 0
    %259 = vmatprep.subr.bf16.mxu0 0
    %260 = vmatpush1.bf16.msra.mxu0 0
    %261 = vmatprep.subr.bf16.mxu0 0
    %262 = vmatpush1.bf16.msra.mxu0 0
    %263 = vmatprep.subr.bf16.mxu0 0
    %264 = vmatpush1.bf16.msra.mxu0 0
    %265 = vmatprep.subr.bf16.mxu0 0
    %266 = vmatpush1.bf16.msra.mxu0 0
    %267 = vmatprep.subr.bf16.mxu0 0
    %268 = vmatpush1.bf16.msra.mxu0 0
    %269 = vmatprep.subr.bf16.mxu0 0
    %270 = vmatpush1.bf16.msra.mxu0 0
    %271 = vmatprep.subr.bf16.mxu0 0
    %272 = vmatpush1.bf16.msra.mxu0 0
    %273 = vmatprep.subr.bf16.mxu0 0
    %274 = vmatpush1.bf16.msra.mxu0 0
    %275 = vmatprep.subr.bf16.mxu0 0
    %276 = vmatpush1.bf16.msra.mxu0 0
    %277 = vmatprep.subr.bf16.mxu0 0
    %278 = vmatpush1.bf16.msra.mxu0 0
    %279 = vmatprep.subr.bf16.mxu0 0
    %280 = vmatpush1.bf16.msra.mxu0 0
    %281 = vmatprep.mubr.bf16.mxu0 0
    %282 = vmatmul.mubr.bf16.gmra.mrb[0].mxu0 %v173
    %v283 = vpop.f32.mrb[0].mxu0
    %v284 = vadd.f32 0.0, %v283
    %v285 = vpop.f32.mrb[0].mxu0
    %v286 = vpop.f32.mrb[0].mxu0
    %v287 = vpop.f32.mrb[0].mxu0
    %288 = vdwg.mxu0
    %290 = vrot.lane.b32.xlu0 %v236, 64
    %v291 = vpop.permute.xlu0 %290
    %v296 = vunpack.c.l.b16 %v52
    %v297 = vunpack.c.l.b16 %v53
    %v298 = vunpack.c.l.b16 %v54
    %v299 = vunpack.c.l.b16 %v55
    %v300 = vpack.c.b16 %v297, %v296
    %v301 = vpack.c.b16 %v299, %v298
    %v305 = vsel %vm171, %v291, 0
    %307 = vmatprep.subr.bf16.mxu0 0
    %308 = vmatpush1.bf16.msra.mxu0 %v300
    %309 = vmatprep.subr.bf16.mxu0 0
    %310 = vmatpush1.bf16.msra.mxu0 %v301
    %311 = vmatprep.subr.bf16.mxu0 0
    %312 = vmatpush1.bf16.msra.mxu0 0
    %313 = vmatprep.subr.bf16.mxu0 0
    %314 = vmatpush1.bf16.msra.mxu0 0
    %315 = vmatprep.subr.bf16.mxu0 0
    %316 = vmatpush1.bf16.msra.mxu0 0
    %317 = vmatprep.subr.bf16.mxu0 0
    %318 = vmatpush1.bf16.msra.mxu0 0
    %319 = vmatprep.subr.bf16.mxu0 0
    %320 = vmatpush1.bf16.msra.mxu0 0
    %321 = vmatprep.subr.bf16.mxu0 0
    %322 = vmatpush1.bf16.msra.mxu0 0
    %323 = vmatprep.subr.bf16.mxu0 0
    %324 = vmatpush1.bf16.msra.mxu0 0
    %325 = vmatprep.subr.bf16.mxu0 0
    %326 = vmatpush1.bf16.msra.mxu0 0
    %327 = vmatprep.subr.bf16.mxu0 0
    %328 = vmatpush1.bf16.msra.mxu0 0
    %329 = vmatprep.subr.bf16.mxu0 0
    %330 = vmatpush1.bf16.msra.mxu0 0
    %331 = vmatprep.subr.bf16.mxu0 0
    %332 = vmatpush1.bf16.msra.mxu0 0
    %333 = vmatprep.subr.bf16.mxu0 0
    %334 = vmatpush1.bf16.msra.mxu0 0
    %335 = vmatprep.subr.bf16.mxu0 0
    %336 = vmatpush1.bf16.msra.mxu0 0
    %337 = vmatprep.subr.bf16.mxu0 0
    %338 = vmatpush1.bf16.msra.mxu0 0
    %339 = vmatprep.mubr.bf16.mxu0 0
    %340 = vmatmul.mubr.bf16.gmra.mrb[0].mxu0 %v305
    %v341 = vpop.f32.mrb[0].mxu0
    %v342 = vadd.f32 %v284, %v341
    %v343 = vpop.f32.mrb[0].mxu0
    %v344 = vpop.f32.mrb[0].mxu0
    %v345 = vpop.f32.mrb[0].mxu0
    %346 = vdwg.mxu0
    %v347 = vadd.f32 %v342, %v62
    %v348 = vtanh.pop %v347
    %v349 = vmul.f32 %v348, 0.5
    %v350 = vadd.f32 %v349, 0.5
    %v351 = vmul.f32 %v350, 0.0
    %353 = vrot.lane.b32.xlu0 %v348, 32
    %v354 = vpop.permute.xlu0 %353
    %v356 = vmul.f32 %v350, %v354
    %358 = vrot.lane.b32.xlu0 %v356, 32
    %v359 = vpop.permute.xlu0 %358
    %v361 = vadd.f32 %v351, %v359
    %v362 = vtanh.pop %v361
    %364 = vrot.lane.b32.xlu0 %v362, 32
    %v365 = vpop.permute.xlu0 %364
    %v367 = vmul.f32 %v350, %v365
    %v368 = vpack.c.bf16 %v367, %v367
    %369 = vrot.lane.b32.xlu0 %v69, 64
    %v370 = vpop.permute.xlu0 %369
    %v372 = vmul.f32 %v367, %v370
    %374 = vrot.lane.b32.xlu0 %v372, 64
    %v375 = vpop.permute.xlu0 %374
    %vm377 = vcmask 257024
    %v378 = vsel %vm377, %v375, 0.0
    %379 = vadd.xlane.f32.xlu0 %v378
    %v380 = vpop.xlane.xlu0 %379
    %v381 = vadd.f32 %v380, %v75
    %v382 = vmul.f32 %v381, 0.5
    %v383 = vtanh.pop %v382
    %v384 = vmul.f32 %v383, 0.5
    %v385 = vadd.f32 %v384, 0.5
    %vm386 = vcmask 3072
    %387 = vst.msk [vmem:[%s7] sm:$0xf] %vm386, %v385
    %388 = vmatprep.subr.bf16.mxu0 0
    %389 = vmatpush1.bf16.msra.mxu0 %v167
    %390 = vmatprep.subr.bf16.mxu0 0
    %391 = vmatpush1.bf16.msra.mxu0 %v168
    %392 = vmatprep.subr.bf16.mxu0 0
    %393 = vmatpush1.bf16.msra.mxu0 0
    %394 = vmatprep.subr.bf16.mxu0 0
    %395 = vmatpush1.bf16.msra.mxu0 0
    %396 = vmatprep.subr.bf16.mxu0 0
    %397 = vmatpush1.bf16.msra.mxu0 0
    %398 = vmatprep.subr.bf16.mxu0 0
    %399 = vmatpush1.bf16.msra.mxu0 0
    %400 = vmatprep.subr.bf16.mxu0 0
    %401 = vmatpush1.bf16.msra.mxu0 0
    %402 = vmatprep.subr.bf16.mxu0 0
    %403 = vmatpush1.bf16.msra.mxu0 0
    %404 = vmatprep.subr.bf16.mxu0 0
    %405 = vmatpush1.bf16.msra.mxu0 0
    %406 = vmatprep.subr.bf16.mxu0 0
    %407 = vmatpush1.bf16.msra.mxu0 0
    %408 = vmatprep.subr.bf16.mxu0 0
    %409 = vmatpush1.bf16.msra.mxu0 0
    %410 = vmatprep.subr.bf16.mxu0 0
    %411 = vmatpush1.bf16.msra.mxu0 0
    %412 = vmatprep.subr.bf16.mxu0 0
    %413 = vmatpush1.bf16.msra.mxu0 0
    %414 = vmatprep.subr.bf16.mxu0 0
    %415 = vmatpush1.bf16.msra.mxu0 0
    %416 = vmatprep.subr.bf16.mxu0 0
    %417 = vmatpush1.bf16.msra.mxu0 0
    %418 = vmatprep.subr.bf16.mxu0 0
    %419 = vmatpush1.bf16.msra.mxu0 0
    %420 = vmatprep.mubr.bf16.mxu0 0
    %421 = vmatmul.mubr.bf16.gmra.mrb[0].mxu0 %v305
    %v422 = vpop.f32.mrb[0].mxu0
    %v423 = vadd.f32 0.0, %v422
    %v424 = vpop.f32.mrb[0].mxu0
    %v425 = vpop.f32.mrb[0].mxu0
    %v426 = vpop.f32.mrb[0].mxu0
    %427 = vdwg.mxu0
    %v429 = vrot.slane %v423, 4
    %v431 = vadd.f32 %v145, %v429
    %v432 = vtanh.pop %v431
    %v433 = vmul.f32 %v432, 0.5
    %v434 = vadd.f32 %v433, 0.5
    %v436 = vrot.slane %v229, 4
    %v438 = vmul.f32 %v434, %v436
    %440 = vrot.lane.b32.xlu0 %v432, 32
    %v441 = vpop.permute.xlu0 %440
    %v443 = vmul.f32 %v434, %v441
    %445 = vrot.lane.b32.xlu0 %v443, 32
    %v446 = vpop.permute.xlu0 %445
    %v448 = vadd.f32 %v438, %v446
    %v449 = vtanh.pop %v448
    %451 = vrot.lane.b32.xlu0 %v449, 32
    %v452 = vpop.permute.xlu0 %451
    %v454 = vmul.f32 %v434, %v452
    %v455 = vpack.c.bf16 %v454, %v454
    %457 = vrot.lane.b32.xlu0 %v368, 64
    %v458 = vpop.permute.xlu0 %457
    %v460 = vsel %vm171, %v458, 0
    %462 = vmatprep.subr.bf16.mxu0 0
    %463 = vmatpush1.bf16.msra.mxu0 %v245
    %464 = vmatprep.subr.bf16.mxu0 0
    %465 = vmatpush1.bf16.msra.mxu0 %v246
    %466 = vmatprep.subr.bf16.mxu0 0
    %467 = vmatpush1.bf16.msra.mxu0 0
    %468 = vmatprep.subr.bf16.mxu0 0
    %469 = vmatpush1.bf16.msra.mxu0 0
    %470 = vmatprep.subr.bf16.mxu0 0
    %471 = vmatpush1.bf16.msra.mxu0 0
    %472 = vmatprep.subr.bf16.mxu0 0
    %473 = vmatpush1.bf16.msra.mxu0 0
    %474 = vmatprep.subr.bf16.mxu0 0
    %475 = vmatpush1.bf16.msra.mxu0 0
    %476 = vmatprep.subr.bf16.mxu0 0
    %477 = vmatpush1.bf16.msra.mxu0 0
    %478 = vmatprep.subr.bf16.mxu0 0
    %479 = vmatpush1.bf16.msra.mxu0 0
    %480 = vmatprep.subr.bf16.mxu0 0
    %481 = vmatpush1.bf16.msra.mxu0 0
    %482 = vmatprep.subr.bf16.mxu0 0
    %483 = vmatpush1.bf16.msra.mxu0 0
    %484 = vmatprep.subr.bf16.mxu0 0
    %485 = vmatpush1.bf16.msra.mxu0 0
    %486 = vmatprep.subr.bf16.mxu0 0
    %487 = vmatpush1.bf16.msra.mxu0 0
    %488 = vmatprep.subr.bf16.mxu0 0
    %489 = vmatpush1.bf16.msra.mxu0 0
    %490 = vmatprep.subr.bf16.mxu0 0
    %491 = vmatpush1.bf16.msra.mxu0 0
    %492 = vmatprep.subr.bf16.mxu0 0
    %493 = vmatpush1.bf16.msra.mxu0 0
    %494 = vmatprep.mubr.bf16.mxu0 0
    %495 = vmatmul.mubr.bf16.gmra.mrb[0].mxu0 %v460
    %v496 = vpop.f32.mrb[0].mxu0
    %v497 = vadd.f32 0.0, %v496
    %v498 = vpop.f32.mrb[0].mxu0
    %v499 = vpop.f32.mrb[0].mxu0
    %v500 = vpop.f32.mrb[0].mxu0
    %501 = vdwg.mxu0
    %v503 = vrot.slane %v455, 2
    %504 = vrot.lane.b32.xlu0 %v503, 64
    %v505 = vpop.permute.xlu0 %504
    %v507 = vsel %vm171, %v505, 0
    %509 = vmatprep.subr.bf16.mxu0 0
    %510 = vmatpush1.bf16.msra.mxu0 %v300
    %511 = vmatprep.subr.bf16.mxu0 0
    %512 = vmatpush1.bf16.msra.mxu0 %v301
    %513 = vmatprep.subr.bf16.mxu0 0
    %514 = vmatpush1.bf16.msra.mxu0 0
    %515 = vmatprep.subr.bf16.mxu0 0
    %516 = vmatpush1.bf16.msra.mxu0 0
    %517 = vmatprep.subr.bf16.mxu0 0
    %518 = vmatpush1.bf16.msra.mxu0 0
    %519 = vmatprep.subr.bf16.mxu0 0
    %520 = vmatpush1.bf16.msra.mxu0 0
    %521 = vmatprep.subr.bf16.mxu0 0
    %522 = vmatpush1.bf16.msra.mxu0 0
    %523 = vmatprep.subr.bf16.mxu0 0
    %524 = vmatpush1.bf16.msra.mxu0 0
    %525 = vmatprep.subr.bf16.mxu0 0
    %526 = vmatpush1.bf16.msra.mxu0 0
    %527 = vmatprep.subr.bf16.mxu0 0
    %528 = vmatpush1.bf16.msra.mxu0 0
    %529 = vmatprep.subr.bf16.mxu0 0
    %530 = vmatpush1.bf16.msra.mxu0 0
    %531 = vmatprep.subr.bf16.mxu0 0
    %532 = vmatpush1.bf16.msra.mxu0 0
    %533 = vmatprep.subr.bf16.mxu0 0
    %534 = vmatpush1.bf16.msra.mxu0 0
    %535 = vmatprep.subr.bf16.mxu0 0
    %536 = vmatpush1.bf16.msra.mxu0 0
    %537 = vmatprep.subr.bf16.mxu0 0
    %538 = vmatpush1.bf16.msra.mxu0 0
    %539 = vmatprep.subr.bf16.mxu0 0
    %540 = vmatpush1.bf16.msra.mxu0 0
    %541 = vmatprep.mubr.bf16.mxu0 0
    %542 = vmatmul.mubr.bf16.gmra.mrb[0].mxu0 %v507
    %v543 = vpop.f32.mrb[0].mxu0
    %v544 = vadd.f32 %v497, %v543
    %v545 = vpop.f32.mrb[0].mxu0
    %v546 = vpop.f32.mrb[0].mxu0
    %v547 = vpop.f32.mrb[0].mxu0
    %548 = vdwg.mxu0
    %v549 = vadd.f32 %v544, %v62
    %v550 = vtanh.pop %v549
    %v551 = vmul.f32 %v550, 0.5
    %v552 = vadd.f32 %v551, 0.5
    %v553 = vmul.f32 %v552, %v361
    %555 = vrot.lane.b32.xlu0 %v550, 32
    %v556 = vpop.permute.xlu0 %555
    %v558 = vmul.f32 %v552, %v556
    %560 = vrot.lane.b32.xlu0 %v558, 32
    %v561 = vpop.permute.xlu0 %560
    %v563 = vadd.f32 %v553, %v561
    %v564 = vtanh.pop %v563
    %566 = vrot.lane.b32.xlu0 %v564, 32
    %v567 = vpop.permute.xlu0 %566
    %v569 = vmul.f32 %v552, %v567
    %v570 = vpack.c.bf16 %v569, %v569
    %v571 = vmul.f32 %v569, %v370
    %573 = vrot.lane.b32.xlu0 %v571, 64
    %v574 = vpop.permute.xlu0 %573
    %v576 = vsel %vm377, %v574, 0.0
    %577 = vadd.xlane.f32.xlu0 %v576
    %v578 = vpop.xlane.xlu0 %577
    %v579 = vadd.f32 %v578, %v75
    %v580 = vmul.f32 %v579, 0.5
    %v581 = vtanh.pop %v580
    %v582 = vmul.f32 %v581, 0.5
    %v583 = vadd.f32 %v582, 0.5
    %s584 = scalar_lea.vmem %s7, 4
    %585 = vst.msk [vmem:[%s584] sm:$0xf] %vm386, %v583
    %586 = vmatprep.subr.bf16.mxu0 0
    %587 = vmatpush1.bf16.msra.mxu0 %v167
    %588 = vmatprep.subr.bf16.mxu0 0
    %589 = vmatpush1.bf16.msra.mxu0 %v168
    %590 = vmatprep.subr.bf16.mxu0 0
    %591 = vmatpush1.bf16.msra.mxu0 0
    %592 = vmatprep.subr.bf16.mxu0 0
    %593 = vmatpush1.bf16.msra.mxu0 0
    %594 = vmatprep.subr.bf16.mxu0 0
    %595 = vmatpush1.bf16.msra.mxu0 0
    %596 = vmatprep.subr.bf16.mxu0 0
    %597 = vmatpush1.bf16.msra.mxu0 0
    %598 = vmatprep.subr.bf16.mxu0 0
    %599 = vmatpush1.bf16.msra.mxu0 0
    %600 = vmatprep.subr.bf16.mxu0 0
    %601 = vmatpush1.bf16.msra.mxu0 0
    %602 = vmatprep.subr.bf16.mxu0 0
    %603 = vmatpush1.bf16.msra.mxu0 0
    %604 = vmatprep.subr.bf16.mxu0 0
    %605 = vmatpush1.bf16.msra.mxu0 0
    %606 = vmatprep.subr.bf16.mxu0 0
    %607 = vmatpush1.bf16.msra.mxu0 0
    %608 = vmatprep.subr.bf16.mxu0 0
    %609 = vmatpush1.bf16.msra.mxu0 0
    %610 = vmatprep.subr.bf16.mxu0 0
    %611 = vmatpush1.bf16.msra.mxu0 0
    %612 = vmatprep.subr.bf16.mxu0 0
    %613 = vmatpush1.bf16.msra.mxu0 0
    %614 = vmatprep.subr.bf16.mxu0 0
    %615 = vmatpush1.bf16.msra.mxu0 0
    %616 = vmatprep.subr.bf16.mxu0 0
    %617 = vmatpush1.bf16.msra.mxu0 0
    %618 = vmatprep.mubr.bf16.mxu0 0
    %619 = vmatmul.mubr.bf16.gmra.mrb[0].mxu0 %v507
    %v620 = vpop.f32.mrb[0].mxu0
    %v621 = vadd.f32 0.0, %v620
    %v622 = vpop.f32.mrb[0].mxu0
    %v623 = vpop.f32.mrb[0].mxu0
    %v624 = vpop.f32.mrb[0].mxu0
    %625 = vdwg.mxu0
    %v626 = vadd.f32 %v148, %v621
    %v627 = vtanh.pop %v626
    %v628 = vmul.f32 %v627, 0.5
    %v629 = vadd.f32 %v628, 0.5
    %v631 = vrot.slane %v448, 4
    %v633 = vmul.f32 %v629, %v631
    %635 = vrot.lane.b32.xlu0 %v627, 32
    %v636 = vpop.permute.xlu0 %635
    %v638 = vmul.f32 %v629, %v636
    %640 = vrot.lane.b32.xlu0 %v638, 32
    %v641 = vpop.permute.xlu0 %640
    %v643 = vadd.f32 %v633, %v641
    %v644 = vtanh.pop %v643
    %646 = vrot.lane.b32.xlu0 %v644, 32
    %v647 = vpop.permute.xlu0 %646
    %v649 = vmul.f32 %v629, %v647
    %v650 = vpack.c.bf16 %v649, %v649
    %652 = vrot.lane.b32.xlu0 %v570, 64
    %v653 = vpop.permute.xlu0 %652
    %v655 = vsel %vm171, %v653, 0
    %657 = vmatprep.subr.bf16.mxu0 0
    %658 = vmatpush1.bf16.msra.mxu0 %v245
    %659 = vmatprep.subr.bf16.mxu0 0
    %660 = vmatpush1.bf16.msra.mxu0 %v246
    %661 = vmatprep.subr.bf16.mxu0 0
    %662 = vmatpush1.bf16.msra.mxu0 0
    %663 = vmatprep.subr.bf16.mxu0 0
    %664 = vmatpush1.bf16.msra.mxu0 0
    %665 = vmatprep.subr.bf16.mxu0 0
    %666 = vmatpush1.bf16.msra.mxu0 0
    %667 = vmatprep.subr.bf16.mxu0 0
    %668 = vmatpush1.bf16.msra.mxu0 0
    %669 = vmatprep.subr.bf16.mxu0 0
    %670 = vmatpush1.bf16.msra.mxu0 0
    %671 = vmatprep.subr.bf16.mxu0 0
    %672 = vmatpush1.bf16.msra.mxu0 0
    %673 = vmatprep.subr.bf16.mxu0 0
    %674 = vmatpush1.bf16.msra.mxu0 0
    %675 = vmatprep.subr.bf16.mxu0 0
    %676 = vmatpush1.bf16.msra.mxu0 0
    %677 = vmatprep.subr.bf16.mxu0 0
    %678 = vmatpush1.bf16.msra.mxu0 0
    %679 = vmatprep.subr.bf16.mxu0 0
    %680 = vmatpush1.bf16.msra.mxu0 0
    %681 = vmatprep.subr.bf16.mxu0 0
    %682 = vmatpush1.bf16.msra.mxu0 0
    %683 = vmatprep.subr.bf16.mxu0 0
    %684 = vmatpush1.bf16.msra.mxu0 0
    %685 = vmatprep.subr.bf16.mxu0 0
    %686 = vmatpush1.bf16.msra.mxu0 0
    %687 = vmatprep.subr.bf16.mxu0 0
    %688 = vmatpush1.bf16.msra.mxu0 0
    %689 = vmatprep.mubr.bf16.mxu0 0
    %690 = vmatmul.mubr.bf16.gmra.mrb[0].mxu0 %v655
    %v691 = vpop.f32.mrb[0].mxu0
    %v692 = vadd.f32 0.0, %v691
    %v693 = vpop.f32.mrb[0].mxu0
    %v694 = vpop.f32.mrb[0].mxu0
    %v695 = vpop.f32.mrb[0].mxu0
    %696 = vdwg.mxu0
    %698 = vrot.lane.b32.xlu0 %v650, 64
    %v699 = vpop.permute.xlu0 %698
    %v701 = vsel %vm171, %v699, 0
    %703 = vmatprep.subr.bf16.mxu0 0
    %704 = vmatpush1.bf16.msra.mxu0 %v300
    %705 = vmatprep.subr.bf16.mxu0 0
    %706 = vmatpush1.bf16.msra.mxu0 %v301
    %707 = vmatprep.subr.bf16.mxu0 0
    %708 = vmatpush1.bf16.msra.mxu0 0
    %709 = vmatprep.subr.bf16.mxu0 0
    %710 = vmatpush1.bf16.msra.mxu0 0
    %711 = vmatprep.subr.bf16.mxu0 0
    %712 = vmatpush1.bf16.msra.mxu0 0
    %713 = vmatprep.subr.bf16.mxu0 0
    %714 = vmatpush1.bf16.msra.mxu0 0
    %715 = vmatprep.subr.bf16.mxu0 0
    %716 = vmatpush1.bf16.msra.mxu0 0
    %717 = vmatprep.subr.bf16.mxu0 0
    %718 = vmatpush1.bf16.msra.mxu0 0
    %719 = vmatprep.subr.bf16.mxu0 0
    %720 = vmatpush1.bf16.msra.mxu0 0
    %721 = vmatprep.subr.bf16.mxu0 0
    %722 = vmatpush1.bf16.msra.mxu0 0
    %723 = vmatprep.subr.bf16.mxu0 0
    %724 = vmatpush1.bf16.msra.mxu0 0
    %725 = vmatprep.subr.bf16.mxu0 0
    %726 = vmatpush1.bf16.msra.mxu0 0
    %727 = vmatprep.subr.bf16.mxu0 0
    %728 = vmatpush1.bf16.msra.mxu0 0
    %729 = vmatprep.subr.bf16.mxu0 0
    %730 = vmatpush1.bf16.msra.mxu0 0
    %731 = vmatprep.subr.bf16.mxu0 0
    %732 = vmatpush1.bf16.msra.mxu0 0
    %733 = vmatprep.subr.bf16.mxu0 0
    %734 = vmatpush1.bf16.msra.mxu0 0
    %735 = vmatprep.mubr.bf16.mxu0 0
    %736 = vmatmul.mubr.bf16.gmra.mrb[0].mxu0 %v701
    %v737 = vpop.f32.mrb[0].mxu0
    %v738 = vadd.f32 %v692, %v737
    %v739 = vpop.f32.mrb[0].mxu0
    %v740 = vpop.f32.mrb[0].mxu0
    %v741 = vpop.f32.mrb[0].mxu0
    %742 = vdwg.mxu0
    %v743 = vadd.f32 %v738, %v62
    %v744 = vtanh.pop %v743
    %v745 = vmul.f32 %v744, 0.5
    %v746 = vadd.f32 %v745, 0.5
    %v747 = vmul.f32 %v746, %v563
    %749 = vrot.lane.b32.xlu0 %v744, 32
    %v750 = vpop.permute.xlu0 %749
    %v752 = vmul.f32 %v746, %v750
    %754 = vrot.lane.b32.xlu0 %v752, 32
    %v755 = vpop.permute.xlu0 %754
    %v757 = vadd.f32 %v747, %v755
    %v758 = vtanh.pop %v757
    %760 = vrot.lane.b32.xlu0 %v758, 32
    %v761 = vpop.permute.xlu0 %760
    %v763 = vmul.f32 %v746, %v761
    %v764 = vpack.c.bf16 %v763, %v763
    %v765 = vmul.f32 %v763, %v370
    %767 = vrot.lane.b32.xlu0 %v765, 64
    %v768 = vpop.permute.xlu0 %767
    %v770 = vsel %vm377, %v768, 0.0
    %771 = vadd.xlane.f32.xlu0 %v770
    %v772 = vpop.xlane.xlu0 %771
    %v773 = vadd.f32 %v772, %v75
    %v774 = vmul.f32 %v773, 0.5
    %v775 = vtanh.pop %v774
    %v776 = vmul.f32 %v775, 0.5
    %v777 = vadd.f32 %v776, 0.5
    %s778 = scalar_lea.vmem %s7, 8
    %779 = vst.msk [vmem:[%s778] sm:$0xf] %vm386, %v777
    %780 = vmatprep.subr.bf16.mxu0 0
    %781 = vmatpush1.bf16.msra.mxu0 %v167
    %782 = vmatprep.subr.bf16.mxu0 0
    %783 = vmatpush1.bf16.msra.mxu0 %v168
    %784 = vmatprep.subr.bf16.mxu0 0
    %785 = vmatpush1.bf16.msra.mxu0 0
    %786 = vmatprep.subr.bf16.mxu0 0
    %787 = vmatpush1.bf16.msra.mxu0 0
    %788 = vmatprep.subr.bf16.mxu0 0
    %789 = vmatpush1.bf16.msra.mxu0 0
    %790 = vmatprep.subr.bf16.mxu0 0
    %791 = vmatpush1.bf16.msra.mxu0 0
    %792 = vmatprep.subr.bf16.mxu0 0
    %793 = vmatpush1.bf16.msra.mxu0 0
    %794 = vmatprep.subr.bf16.mxu0 0
    %795 = vmatpush1.bf16.msra.mxu0 0
    %796 = vmatprep.subr.bf16.mxu0 0
    %797 = vmatpush1.bf16.msra.mxu0 0
    %798 = vmatprep.subr.bf16.mxu0 0
    %799 = vmatpush1.bf16.msra.mxu0 0
    %800 = vmatprep.subr.bf16.mxu0 0
    %801 = vmatpush1.bf16.msra.mxu0 0
    %802 = vmatprep.subr.bf16.mxu0 0
    %803 = vmatpush1.bf16.msra.mxu0 0
    %804 = vmatprep.subr.bf16.mxu0 0
    %805 = vmatpush1.bf16.msra.mxu0 0
    %806 = vmatprep.subr.bf16.mxu0 0
    %807 = vmatpush1.bf16.msra.mxu0 0
    %808 = vmatprep.subr.bf16.mxu0 0
    %809 = vmatpush1.bf16.msra.mxu0 0
    %810 = vmatprep.subr.bf16.mxu0 0
    %811 = vmatpush1.bf16.msra.mxu0 0
    %812 = vmatprep.mubr.bf16.mxu0 0
    %813 = vmatmul.mubr.bf16.gmra.mrb[0].mxu0 %v701
    %v814 = vpop.f32.mrb[0].mxu0
    %v815 = vadd.f32 0.0, %v814
    %v816 = vpop.f32.mrb[0].mxu0
    %v817 = vpop.f32.mrb[0].mxu0
    %v818 = vpop.f32.mrb[0].mxu0
    %819 = vdwg.mxu0
    %v821 = vrot.slane %v815, 4
    %v823 = vadd.f32 %v148, %v821
    %v824 = vtanh.pop %v823
    %v825 = vmul.f32 %v824, 0.5
    %v826 = vadd.f32 %v825, 0.5
    %v828 = vrot.slane %v643, 4
    %v830 = vmul.f32 %v826, %v828
    %832 = vrot.lane.b32.xlu0 %v824, 32
    %v833 = vpop.permute.xlu0 %832
    %v835 = vmul.f32 %v826, %v833
    %837 = vrot.lane.b32.xlu0 %v835, 32
    %v838 = vpop.permute.xlu0 %837
    %v840 = vadd.f32 %v830, %v838
    %v841 = vtanh.pop %v840
    %843 = vrot.lane.b32.xlu0 %v841, 32
    %v844 = vpop.permute.xlu0 %843
    %v846 = vmul.f32 %v826, %v844
    %v847 = vpack.c.bf16 %v846, %v846
    %849 = vrot.lane.b32.xlu0 %v764, 64
    %v850 = vpop.permute.xlu0 %849
    %v852 = vsel %vm171, %v850, 0
    %854 = vmatprep.subr.bf16.mxu0 0
    %855 = vmatpush1.bf16.msra.mxu0 %v245
    %856 = vmatprep.subr.bf16.mxu0 0
    %857 = vmatpush1.bf16.msra.mxu0 %v246
    %858 = vmatprep.subr.bf16.mxu0 0
    %859 = vmatpush1.bf16.msra.mxu0 0
    %860 = vmatprep.subr.bf16.mxu0 0
    %861 = vmatpush1.bf16.msra.mxu0 0
    %862 = vmatprep.subr.bf16.mxu0 0
    %863 = vmatpush1.bf16.msra.mxu0 0
    %864 = vmatprep.subr.bf16.mxu0 0
    %865 = vmatpush1.bf16.msra.mxu0 0
    %866 = vmatprep.subr.bf16.mxu0 0
    %867 = vmatpush1.bf16.msra.mxu0 0
    %868 = vmatprep.subr.bf16.mxu0 0
    %869 = vmatpush1.bf16.msra.mxu0 0
    %870 = vmatprep.subr.bf16.mxu0 0
    %871 = vmatpush1.bf16.msra.mxu0 0
    %872 = vmatprep.subr.bf16.mxu0 0
    %873 = vmatpush1.bf16.msra.mxu0 0
    %874 = vmatprep.subr.bf16.mxu0 0
    %875 = vmatpush1.bf16.msra.mxu0 0
    %876 = vmatprep.subr.bf16.mxu0 0
    %877 = vmatpush1.bf16.msra.mxu0 0
    %878 = vmatprep.subr.bf16.mxu0 0
    %879 = vmatpush1.bf16.msra.mxu0 0
    %880 = vmatprep.subr.bf16.mxu0 0
    %881 = vmatpush1.bf16.msra.mxu0 0
    %882 = vmatprep.subr.bf16.mxu0 0
    %883 = vmatpush1.bf16.msra.mxu0 0
    %884 = vmatprep.subr.bf16.mxu0 0
    %885 = vmatpush1.bf16.msra.mxu0 0
    %886 = vmatprep.mubr.bf16.mxu0 0
    %887 = vmatmul.mubr.bf16.gmra.mrb[0].mxu0 %v852
    %v888 = vpop.f32.mrb[0].mxu0
    %v889 = vadd.f32 0.0, %v888
    %v890 = vpop.f32.mrb[0].mxu0
    %v891 = vpop.f32.mrb[0].mxu0
    %v892 = vpop.f32.mrb[0].mxu0
    %893 = vdwg.mxu0
    %v895 = vrot.slane %v847, 2
    %896 = vrot.lane.b32.xlu0 %v895, 64
    %v897 = vpop.permute.xlu0 %896
    %v899 = vsel %vm171, %v897, 0
    %901 = vmatprep.subr.bf16.mxu0 0
    %902 = vmatpush1.bf16.msra.mxu0 %v300
    %903 = vmatprep.subr.bf16.mxu0 0
    %904 = vmatpush1.bf16.msra.mxu0 %v301
    %905 = vmatprep.subr.bf16.mxu0 0
    %906 = vmatpush1.bf16.msra.mxu0 0
    %907 = vmatprep.subr.bf16.mxu0 0
    %908 = vmatpush1.bf16.msra.mxu0 0
    %909 = vmatprep.subr.bf16.mxu0 0
    %910 = vmatpush1.bf16.msra.mxu0 0
    %911 = vmatprep.subr.bf16.mxu0 0
    %912 = vmatpush1.bf16.msra.mxu0 0
    %913 = vmatprep.subr.bf16.mxu0 0
    %914 = vmatpush1.bf16.msra.mxu0 0
    %915 = vmatprep.subr.bf16.mxu0 0
    %916 = vmatpush1.bf16.msra.mxu0 0
    %917 = vmatprep.subr.bf16.mxu0 0
    %918 = vmatpush1.bf16.msra.mxu0 0
    %919 = vmatprep.subr.bf16.mxu0 0
    %920 = vmatpush1.bf16.msra.mxu0 0
    %921 = vmatprep.subr.bf16.mxu0 0
    %922 = vmatpush1.bf16.msra.mxu0 0
    %923 = vmatprep.subr.bf16.mxu0 0
    %924 = vmatpush1.bf16.msra.mxu0 0
    %925 = vmatprep.subr.bf16.mxu0 0
    %926 = vmatpush1.bf16.msra.mxu0 0
    %927 = vmatprep.subr.bf16.mxu0 0
    %928 = vmatpush1.bf16.msra.mxu0 0
    %929 = vmatprep.subr.bf16.mxu0 0
    %930 = vmatpush1.bf16.msra.mxu0 0
    %931 = vmatprep.subr.bf16.mxu0 0
    %932 = vmatpush1.bf16.msra.mxu0 0
    %933 = vmatprep.mubr.bf16.mxu0 0
    %934 = vmatmul.mubr.bf16.gmra.mrb[0].mxu0 %v899
    %v935 = vpop.f32.mrb[0].mxu0
    %v936 = vadd.f32 %v889, %v935
    %v937 = vpop.f32.mrb[0].mxu0
    %v938 = vpop.f32.mrb[0].mxu0
    %v939 = vpop.f32.mrb[0].mxu0
    %940 = vdwg.mxu0
    %v941 = vadd.f32 %v936, %v62
    %v942 = vtanh.pop %v941
    %v943 = vmul.f32 %v942, 0.5
    %v944 = vadd.f32 %v943, 0.5
    %v945 = vmul.f32 %v944, %v757
    %947 = vrot.lane.b32.xlu0 %v942, 32
    %v948 = vpop.permute.xlu0 %947
    %v950 = vmul.f32 %v944, %v948
    %952 = vrot.lane.b32.xlu0 %v950, 32
    %v953 = vpop.permute.xlu0 %952
    %v955 = vadd.f32 %v945, %v953
    %v956 = vtanh.pop %v955
    %958 = vrot.lane.b32.xlu0 %v956, 32
    %v959 = vpop.permute.xlu0 %958
    %v961 = vmul.f32 %v944, %v959
    %v962 = vpack.c.bf16 %v961, %v961
    %v963 = vmul.f32 %v961, %v370
    %965 = vrot.lane.b32.xlu0 %v963, 64
    %v966 = vpop.permute.xlu0 %965
    %v968 = vsel %vm377, %v966, 0.0
    %969 = vadd.xlane.f32.xlu0 %v968
    %v970 = vpop.xlane.xlu0 %969
    %v971 = vadd.f32 %v970, %v75
    %v972 = vmul.f32 %v971, 0.5
    %v973 = vtanh.pop %v972
    %v974 = vmul.f32 %v973, 0.5
    %v975 = vadd.f32 %v974, 0.5
    %s976 = scalar_lea.vmem %s7, 12
    %977 = vst.msk [vmem:[%s976] sm:$0xf] %vm386, %v975
    %978 = vmatprep.subr.bf16.mxu0 0
    %979 = vmatpush1.bf16.msra.mxu0 %v167
    %980 = vmatprep.subr.bf16.mxu0 0
    %981 = vmatpush1.bf16.msra.mxu0 %v168
    %982 = vmatprep.subr.bf16.mxu0 0
    %983 = vmatpush1.bf16.msra.mxu0 0
    %984 = vmatprep.subr.bf16.mxu0 0
    %985 = vmatpush1.bf16.msra.mxu0 0
    %986 = vmatprep.subr.bf16.mxu0 0
    %987 = vmatpush1.bf16.msra.mxu0 0
    %988 = vmatprep.subr.bf16.mxu0 0
    %989 = vmatpush1.bf16.msra.mxu0 0
    %990 = vmatprep.subr.bf16.mxu0 0
    %991 = vmatpush1.bf16.msra.mxu0 0
    %992 = vmatprep.subr.bf16.mxu0 0
    %993 = vmatpush1.bf16.msra.mxu0 0
    %994 = vmatprep.subr.bf16.mxu0 0
    %995 = vmatpush1.bf16.msra.mxu0 0
    %996 = vmatprep.subr.bf16.mxu0 0
    %997 = vmatpush1.bf16.msra.mxu0 0
    %998 = vmatprep.subr.bf16.mxu0 0
    %999 = vmatpush1.bf16.msra.mxu0 0
    %1000 = vmatprep.subr.bf16.mxu0 0
    %1001 = vmatpush1.bf16.msra.mxu0 0
    %1002 = vmatprep.subr.bf16.mxu0 0
    %1003 = vmatpush1.bf16.msra.mxu0 0
    %1004 = vmatprep.subr.bf16.mxu0 0
    %1005 = vmatpush1.bf16.msra.mxu0 0
    %1006 = vmatprep.subr.bf16.mxu0 0
    %1007 = vmatpush1.bf16.msra.mxu0 0
    %1008 = vmatprep.subr.bf16.mxu0 0
    %1009 = vmatpush1.bf16.msra.mxu0 0
    %1010 = vmatprep.mubr.bf16.mxu0 0
    %1011 = vmatmul.mubr.bf16.gmra.mrb[0].mxu0 %v899
    %v1012 = vpop.f32.mrb[0].mxu0
    %v1013 = vadd.f32 0.0, %v1012
    %v1014 = vpop.f32.mrb[0].mxu0
    %v1015 = vpop.f32.mrb[0].mxu0
    %v1016 = vpop.f32.mrb[0].mxu0
    %1017 = vdwg.mxu0
    %v1018 = vadd.f32 %v153, %v1013
    %v1019 = vtanh.pop %v1018
    %v1020 = vmul.f32 %v1019, 0.5
    %v1021 = vadd.f32 %v1020, 0.5
    %v1023 = vrot.slane %v840, 4
    %v1025 = vmul.f32 %v1021, %v1023
    %1027 = vrot.lane.b32.xlu0 %v1019, 32
    %v1028 = vpop.permute.xlu0 %1027
    %v1030 = vmul.f32 %v1021, %v1028
    %1032 = vrot.lane.b32.xlu0 %v1030, 32
    %v1033 = vpop.permute.xlu0 %1032
    %v1035 = vadd.f32 %v1025, %v1033
    %v1036 = vtanh.pop %v1035
    %1038 = vrot.lane.b32.xlu0 %v1036, 32
    %v1039 = vpop.permute.xlu0 %1038
    %v1041 = vmul.f32 %v1021, %v1039
    %v1042 = vpack.c.bf16 %v1041, %v1041
    %1044 = vrot.lane.b32.xlu0 %v962, 64
    %v1045 = vpop.permute.xlu0 %1044
    %v1047 = vsel %vm171, %v1045, 0
    %1049 = vmatprep.subr.bf16.mxu0 0
    %1050 = vmatpush1.bf16.msra.mxu0 %v245
    %1051 = vmatprep.subr.bf16.mxu0 0
    %1052 = vmatpush1.bf16.msra.mxu0 %v246
    %1053 = vmatprep.subr.bf16.mxu0 0
    %1054 = vmatpush1.bf16.msra.mxu0 0
    %1055 = vmatprep.subr.bf16.mxu0 0
    %1056 = vmatpush1.bf16.msra.mxu0 0
    %1057 = vmatprep.subr.bf16.mxu0 0
    %1058 = vmatpush1.bf16.msra.mxu0 0
    %1059 = vmatprep.subr.bf16.mxu0 0
    %1060 = vmatpush1.bf16.msra.mxu0 0
    %1061 = vmatprep.subr.bf16.mxu0 0
    %1062 = vmatpush1.bf16.msra.mxu0 0
    %1063 = vmatprep.subr.bf16.mxu0 0
    %1064 = vmatpush1.bf16.msra.mxu0 0
    %1065 = vmatprep.subr.bf16.mxu0 0
    %1066 = vmatpush1.bf16.msra.mxu0 0
    %1067 = vmatprep.subr.bf16.mxu0 0
    %1068 = vmatpush1.bf16.msra.mxu0 0
    %1069 = vmatprep.subr.bf16.mxu0 0
    %1070 = vmatpush1.bf16.msra.mxu0 0
    %1071 = vmatprep.subr.bf16.mxu0 0
    %1072 = vmatpush1.bf16.msra.mxu0 0
    %1073 = vmatprep.subr.bf16.mxu0 0
    %1074 = vmatpush1.bf16.msra.mxu0 0
    %1075 = vmatprep.subr.bf16.mxu0 0
    %1076 = vmatpush1.bf16.msra.mxu0 0
    %1077 = vmatprep.subr.bf16.mxu0 0
    %1078 = vmatpush1.bf16.msra.mxu0 0
    %1079 = vmatprep.subr.bf16.mxu0 0
    %1080 = vmatpush1.bf16.msra.mxu0 0
    %1081 = vmatprep.mubr.bf16.mxu0 0
    %1082 = vmatmul.mubr.bf16.gmra.mrb[0].mxu0 %v1047
    %v1083 = vpop.f32.mrb[0].mxu0
    %v1084 = vadd.f32 0.0, %v1083
    %v1085 = vpop.f32.mrb[0].mxu0
    %v1086 = vpop.f32.mrb[0].mxu0
    %v1087 = vpop.f32.mrb[0].mxu0
    %1088 = vdwg.mxu0
    %1090 = vrot.lane.b32.xlu0 %v1042, 64
    %v1091 = vpop.permute.xlu0 %1090
    %v1093 = vsel %vm171, %v1091, 0
    %1095 = vmatprep.subr.bf16.mxu0 0
    %1096 = vmatpush1.bf16.msra.mxu0 %v300
    %1097 = vmatprep.subr.bf16.mxu0 0
    %1098 = vmatpush1.bf16.msra.mxu0 %v301
    %1099 = vmatprep.subr.bf16.mxu0 0
    %1100 = vmatpush1.bf16.msra.mxu0 0
    %1101 = vmatprep.subr.bf16.mxu0 0
    %1102 = vmatpush1.bf16.msra.mxu0 0
    %1103 = vmatprep.subr.bf16.mxu0 0
    %1104 = vmatpush1.bf16.msra.mxu0 0
    %1105 = vmatprep.subr.bf16.mxu0 0
    %1106 = vmatpush1.bf16.msra.mxu0 0
    %1107 = vmatprep.subr.bf16.mxu0 0
    %1108 = vmatpush1.bf16.msra.mxu0 0
    %1109 = vmatprep.subr.bf16.mxu0 0
    %1110 = vmatpush1.bf16.msra.mxu0 0
    %1111 = vmatprep.subr.bf16.mxu0 0
    %1112 = vmatpush1.bf16.msra.mxu0 0
    %1113 = vmatprep.subr.bf16.mxu0 0
    %1114 = vmatpush1.bf16.msra.mxu0 0
    %1115 = vmatprep.subr.bf16.mxu0 0
    %1116 = vmatpush1.bf16.msra.mxu0 0
    %1117 = vmatprep.subr.bf16.mxu0 0
    %1118 = vmatpush1.bf16.msra.mxu0 0
    %1119 = vmatprep.subr.bf16.mxu0 0
    %1120 = vmatpush1.bf16.msra.mxu0 0
    %1121 = vmatprep.subr.bf16.mxu0 0
    %1122 = vmatpush1.bf16.msra.mxu0 0
    %1123 = vmatprep.subr.bf16.mxu0 0
    %1124 = vmatpush1.bf16.msra.mxu0 0
    %1125 = vmatprep.subr.bf16.mxu0 0
    %1126 = vmatpush1.bf16.msra.mxu0 0
    %1127 = vmatprep.mubr.bf16.mxu0 0
    %1128 = vmatmul.mubr.bf16.gmra.mrb[0].mxu0 %v1093
    %v1129 = vpop.f32.mrb[0].mxu0
    %v1130 = vadd.f32 %v1084, %v1129
    %v1131 = vpop.f32.mrb[0].mxu0
    %v1132 = vpop.f32.mrb[0].mxu0
    %v1133 = vpop.f32.mrb[0].mxu0
    %1134 = vdwg.mxu0
    %v1135 = vadd.f32 %v1130, %v62
    %v1136 = vtanh.pop %v1135
    %v1137 = vmul.f32 %v1136, 0.5
    %v1138 = vadd.f32 %v1137, 0.5
    %v1139 = vmul.f32 %v1138, %v955
    %1141 = vrot.lane.b32.xlu0 %v1136, 32
    %v1142 = vpop.permute.xlu0 %1141
    %v1144 = vmul.f32 %v1138, %v1142
    %1146 = vrot.lane.b32.xlu0 %v1144, 32
    %v1147 = vpop.permute.xlu0 %1146
    %v1149 = vadd.f32 %v1139, %v1147
    %v1150 = vtanh.pop %v1149
    %1152 = vrot.lane.b32.xlu0 %v1150, 32
    %v1153 = vpop.permute.xlu0 %1152
    %v1155 = vmul.f32 %v1138, %v1153
    %v1156 = vpack.c.bf16 %v1155, %v1155
    %v1157 = vmul.f32 %v1155, %v370
    %1159 = vrot.lane.b32.xlu0 %v1157, 64
    %v1160 = vpop.permute.xlu0 %1159
    %v1162 = vsel %vm377, %v1160, 0.0
    %1163 = vadd.xlane.f32.xlu0 %v1162
    %v1164 = vpop.xlane.xlu0 %1163
    %v1165 = vadd.f32 %v1164, %v75
    %v1166 = vmul.f32 %v1165, 0.5
    %v1167 = vtanh.pop %v1166
    %v1168 = vmul.f32 %v1167, 0.5
    %v1169 = vadd.f32 %v1168, 0.5
    %s1170 = scalar_lea.vmem %s7, 16
    %1171 = vst.msk [vmem:[%s1170] sm:$0xf] %vm386, %v1169
    %1172 = vmatprep.subr.bf16.mxu0 0
    %1173 = vmatpush1.bf16.msra.mxu0 %v167
    %1174 = vmatprep.subr.bf16.mxu0 0
    %1175 = vmatpush1.bf16.msra.mxu0 %v168
    %1176 = vmatprep.subr.bf16.mxu0 0
    %1177 = vmatpush1.bf16.msra.mxu0 0
    %1178 = vmatprep.subr.bf16.mxu0 0
    %1179 = vmatpush1.bf16.msra.mxu0 0
    %1180 = vmatprep.subr.bf16.mxu0 0
    %1181 = vmatpush1.bf16.msra.mxu0 0
    %1182 = vmatprep.subr.bf16.mxu0 0
    %1183 = vmatpush1.bf16.msra.mxu0 0
    %1184 = vmatprep.subr.bf16.mxu0 0
    %1185 = vmatpush1.bf16.msra.mxu0 0
    %1186 = vmatprep.subr.bf16.mxu0 0
    %1187 = vmatpush1.bf16.msra.mxu0 0
    %1188 = vmatprep.subr.bf16.mxu0 0
    %1189 = vmatpush1.bf16.msra.mxu0 0
    %1190 = vmatprep.subr.bf16.mxu0 0
    %1191 = vmatpush1.bf16.msra.mxu0 0
    %1192 = vmatprep.subr.bf16.mxu0 0
    %1193 = vmatpush1.bf16.msra.mxu0 0
    %1194 = vmatprep.subr.bf16.mxu0 0
    %1195 = vmatpush1.bf16.msra.mxu0 0
    %1196 = vmatprep.subr.bf16.mxu0 0
    %1197 = vmatpush1.bf16.msra.mxu0 0
    %1198 = vmatprep.subr.bf16.mxu0 0
    %1199 = vmatpush1.bf16.msra.mxu0 0
    %1200 = vmatprep.subr.bf16.mxu0 0
    %1201 = vmatpush1.bf16.msra.mxu0 0
    %1202 = vmatprep.subr.bf16.mxu0 0
    %1203 = vmatpush1.bf16.msra.mxu0 0
    %1204 = vmatprep.mubr.bf16.mxu0 0
    %1205 = vmatmul.mubr.bf16.gmra.mrb[0].mxu0 %v1093
    %v1206 = vpop.f32.mrb[0].mxu0
    %v1207 = vadd.f32 0.0, %v1206
    %v1208 = vpop.f32.mrb[0].mxu0
    %v1209 = vpop.f32.mrb[0].mxu0
    %v1210 = vpop.f32.mrb[0].mxu0
    %1211 = vdwg.mxu0
    %v1213 = vrot.slane %v1207, 4
    %v1215 = vadd.f32 %v153, %v1213
    %v1216 = vtanh.pop %v1215
    %v1217 = vmul.f32 %v1216, 0.5
    %v1218 = vadd.f32 %v1217, 0.5
    %v1220 = vrot.slane %v1035, 4
    %v1222 = vmul.f32 %v1218, %v1220
    %1224 = vrot.lane.b32.xlu0 %v1216, 32
    %v1225 = vpop.permute.xlu0 %1224
    %v1227 = vmul.f32 %v1218, %v1225
    %1229 = vrot.lane.b32.xlu0 %v1227, 32
    %v1230 = vpop.permute.xlu0 %1229
    %v1232 = vadd.f32 %v1222, %v1230
    %v1233 = vtanh.pop %v1232
    %1235 = vrot.lane.b32.xlu0 %v1233, 32
    %v1236 = vpop.permute.xlu0 %1235
    %v1238 = vmul.f32 %v1218, %v1236
    %v1239 = vpack.c.bf16 %v1238, %v1238
    %1241 = vrot.lane.b32.xlu0 %v1156, 64
    %v1242 = vpop.permute.xlu0 %1241
    %v1244 = vsel %vm171, %v1242, 0
    %1246 = vmatprep.subr.bf16.mxu0 0
    %1247 = vmatpush1.bf16.msra.mxu0 %v245
    %1248 = vmatprep.subr.bf16.mxu0 0
    %1249 = vmatpush1.bf16.msra.mxu0 %v246
    %1250 = vmatprep.subr.bf16.mxu0 0
    %1251 = vmatpush1.bf16.msra.mxu0 0
    %1252 = vmatprep.subr.bf16.mxu0 0
    %1253 = vmatpush1.bf16.msra.mxu0 0
    %1254 = vmatprep.subr.bf16.mxu0 0
    %1255 = vmatpush1.bf16.msra.mxu0 0
    %1256 = vmatprep.subr.bf16.mxu0 0
    %1257 = vmatpush1.bf16.msra.mxu0 0
    %1258 = vmatprep.subr.bf16.mxu0 0
    %1259 = vmatpush1.bf16.msra.mxu0 0
    %1260 = vmatprep.subr.bf16.mxu0 0
    %1261 = vmatpush1.bf16.msra.mxu0 0
    %1262 = vmatprep.subr.bf16.mxu0 0
    %1263 = vmatpush1.bf16.msra.mxu0 0
    %1264 = vmatprep.subr.bf16.mxu0 0
    %1265 = vmatpush1.bf16.msra.mxu0 0
    %1266 = vmatprep.subr.bf16.mxu0 0
    %1267 = vmatpush1.bf16.msra.mxu0 0
    %1268 = vmatprep.subr.bf16.mxu0 0
    %1269 = vmatpush1.bf16.msra.mxu0 0
    %1270 = vmatprep.subr.bf16.mxu0 0
    %1271 = vmatpush1.bf16.msra.mxu0 0
    %1272 = vmatprep.subr.bf16.mxu0 0
    %1273 = vmatpush1.bf16.msra.mxu0 0
    %1274 = vmatprep.subr.bf16.mxu0 0
    %1275 = vmatpush1.bf16.msra.mxu0 0
    %1276 = vmatprep.subr.bf16.mxu0 0
    %1277 = vmatpush1.bf16.msra.mxu0 0
    %1278 = vmatprep.mubr.bf16.mxu0 0
    %1279 = vmatmul.mubr.bf16.gmra.mrb[0].mxu0 %v1244
    %v1280 = vpop.f32.mrb[0].mxu0
    %v1281 = vadd.f32 0.0, %v1280
    %v1282 = vpop.f32.mrb[0].mxu0
    %v1283 = vpop.f32.mrb[0].mxu0
    %v1284 = vpop.f32.mrb[0].mxu0
    %1285 = vdwg.mxu0
    %v1287 = vrot.slane %v1239, 2
    %1288 = vrot.lane.b32.xlu0 %v1287, 64
    %v1289 = vpop.permute.xlu0 %1288
    %v1291 = vsel %vm171, %v1289, 0
    %1293 = vmatprep.subr.bf16.mxu0 0
    %1294 = vmatpush1.bf16.msra.mxu0 %v300
    %1295 = vmatprep.subr.bf16.mxu0 0
    %1296 = vmatpush1.bf16.msra.mxu0 %v301
    %1297 = vmatprep.subr.bf16.mxu0 0
    %1298 = vmatpush1.bf16.msra.mxu0 0
    %1299 = vmatprep.subr.bf16.mxu0 0
    %1300 = vmatpush1.bf16.msra.mxu0 0
    %1301 = vmatprep.subr.bf16.mxu0 0
    %1302 = vmatpush1.bf16.msra.mxu0 0
    %1303 = vmatprep.subr.bf16.mxu0 0
    %1304 = vmatpush1.bf16.msra.mxu0 0
    %1305 = vmatprep.subr.bf16.mxu0 0
    %1306 = vmatpush1.bf16.msra.mxu0 0
    %1307 = vmatprep.subr.bf16.mxu0 0
    %1308 = vmatpush1.bf16.msra.mxu0 0
    %1309 = vmatprep.subr.bf16.mxu0 0
    %1310 = vmatpush1.bf16.msra.mxu0 0
    %1311 = vmatprep.subr.bf16.mxu0 0
    %1312 = vmatpush1.bf16.msra.mxu0 0
    %1313 = vmatprep.subr.bf16.mxu0 0
    %1314 = vmatpush1.bf16.msra.mxu0 0
    %1315 = vmatprep.subr.bf16.mxu0 0
    %1316 = vmatpush1.bf16.msra.mxu0 0
    %1317 = vmatprep.subr.bf16.mxu0 0
    %1318 = vmatpush1.bf16.msra.mxu0 0
    %1319 = vmatprep.subr.bf16.mxu0 0
    %1320 = vmatpush1.bf16.msra.mxu0 0
    %1321 = vmatprep.subr.bf16.mxu0 0
    %1322 = vmatpush1.bf16.msra.mxu0 0
    %1323 = vmatprep.subr.bf16.mxu0 0
    %1324 = vmatpush1.bf16.msra.mxu0 0
    %1325 = vmatprep.mubr.bf16.mxu0 0
    %1326 = vmatmul.mubr.bf16.gmra.mrb[0].mxu0 %v1291
    %v1327 = vpop.f32.mrb[0].mxu0
    %v1328 = vadd.f32 %v1281, %v1327
    %v1329 = vpop.f32.mrb[0].mxu0
    %v1330 = vpop.f32.mrb[0].mxu0
    %v1331 = vpop.f32.mrb[0].mxu0
    %1332 = vdwg.mxu0
    %v1333 = vadd.f32 %v1328, %v62
    %v1334 = vtanh.pop %v1333
    %v1335 = vmul.f32 %v1334, 0.5
    %v1336 = vadd.f32 %v1335, 0.5
    %v1337 = vmul.f32 %v1336, %v1149
    %1339 = vrot.lane.b32.xlu0 %v1334, 32
    %v1340 = vpop.permute.xlu0 %1339
    %v1342 = vmul.f32 %v1336, %v1340
    %1344 = vrot.lane.b32.xlu0 %v1342, 32
    %v1345 = vpop.permute.xlu0 %1344
    %v1347 = vadd.f32 %v1337, %v1345
    %v1348 = vtanh.pop %v1347
    %1350 = vrot.lane.b32.xlu0 %v1348, 32
    %v1351 = vpop.permute.xlu0 %1350
    %v1353 = vmul.f32 %v1336, %v1351
    %v1354 = vpack.c.bf16 %v1353, %v1353
    %v1355 = vmul.f32 %v1353, %v370
    %1357 = vrot.lane.b32.xlu0 %v1355, 64
    %v1358 = vpop.permute.xlu0 %1357
    %v1360 = vsel %vm377, %v1358, 0.0
    %1361 = vadd.xlane.f32.xlu0 %v1360
    %v1362 = vpop.xlane.xlu0 %1361
    %v1363 = vadd.f32 %v1362, %v75
    %v1364 = vmul.f32 %v1363, 0.5
    %v1365 = vtanh.pop %v1364
    %v1366 = vmul.f32 %v1365, 0.5
    %v1367 = vadd.f32 %v1366, 0.5
    %s1368 = scalar_lea.vmem %s7, 20
    %1369 = vst.msk [vmem:[%s1368] sm:$0xf] %vm386, %v1367
    %1370 = vmatprep.subr.bf16.mxu0 0
    %1371 = vmatpush1.bf16.msra.mxu0 %v167
    %1372 = vmatprep.subr.bf16.mxu0 0
    %1373 = vmatpush1.bf16.msra.mxu0 %v168
    %1374 = vmatprep.subr.bf16.mxu0 0
    %1375 = vmatpush1.bf16.msra.mxu0 0
    %1376 = vmatprep.subr.bf16.mxu0 0
    %1377 = vmatpush1.bf16.msra.mxu0 0
    %1378 = vmatprep.subr.bf16.mxu0 0
    %1379 = vmatpush1.bf16.msra.mxu0 0
    %1380 = vmatprep.subr.bf16.mxu0 0
    %1381 = vmatpush1.bf16.msra.mxu0 0
    %1382 = vmatprep.subr.bf16.mxu0 0
    %1383 = vmatpush1.bf16.msra.mxu0 0
    %1384 = vmatprep.subr.bf16.mxu0 0
    %1385 = vmatpush1.bf16.msra.mxu0 0
    %1386 = vmatprep.subr.bf16.mxu0 0
    %1387 = vmatpush1.bf16.msra.mxu0 0
    %1388 = vmatprep.subr.bf16.mxu0 0
    %1389 = vmatpush1.bf16.msra.mxu0 0
    %1390 = vmatprep.subr.bf16.mxu0 0
    %1391 = vmatpush1.bf16.msra.mxu0 0
    %1392 = vmatprep.subr.bf16.mxu0 0
    %1393 = vmatpush1.bf16.msra.mxu0 0
    %1394 = vmatprep.subr.bf16.mxu0 0
    %1395 = vmatpush1.bf16.msra.mxu0 0
    %1396 = vmatprep.subr.bf16.mxu0 0
    %1397 = vmatpush1.bf16.msra.mxu0 0
    %1398 = vmatprep.subr.bf16.mxu0 0
    %1399 = vmatpush1.bf16.msra.mxu0 0
    %1400 = vmatprep.subr.bf16.mxu0 0
    %1401 = vmatpush1.bf16.msra.mxu0 0
    %1402 = vmatprep.mubr.bf16.mxu0 0
    %1403 = vmatmul.mubr.bf16.gmra.mrb[0].mxu0 %v1291
    %v1404 = vpop.f32.mrb[0].mxu0
    %v1405 = vadd.f32 0.0, %v1404
    %v1406 = vpop.f32.mrb[0].mxu0
    %v1407 = vpop.f32.mrb[0].mxu0
    %v1408 = vpop.f32.mrb[0].mxu0
    %1409 = vdwg.mxu0
    %v1410 = vadd.f32 %v156, %v1405
    %v1411 = vtanh.pop %v1410
    %v1412 = vmul.f32 %v1411, 0.5
    %v1413 = vadd.f32 %v1412, 0.5
    %v1415 = vrot.slane %v1232, 4
    %v1417 = vmul.f32 %v1413, %v1415
    %1419 = vrot.lane.b32.xlu0 %v1411, 32
    %v1420 = vpop.permute.xlu0 %1419
    %v1422 = vmul.f32 %v1413, %v1420
    %1424 = vrot.lane.b32.xlu0 %v1422, 32
    %v1425 = vpop.permute.xlu0 %1424
    %v1427 = vadd.f32 %v1417, %v1425
    %v1428 = vtanh.pop %v1427
    %1430 = vrot.lane.b32.xlu0 %v1428, 32
    %v1431 = vpop.permute.xlu0 %1430
    %v1433 = vmul.f32 %v1413, %v1431
    %v1434 = vpack.c.bf16 %v1433, %v1433
    %1436 = vrot.lane.b32.xlu0 %v1354, 64
    %v1437 = vpop.permute.xlu0 %1436
    %v1439 = vsel %vm171, %v1437, 0
    %1441 = vmatprep.subr.bf16.mxu0 0
    %1442 = vmatpush1.bf16.msra.mxu0 %v245
    %1443 = vmatprep.subr.bf16.mxu0 0
    %1444 = vmatpush1.bf16.msra.mxu0 %v246
    %1445 = vmatprep.subr.bf16.mxu0 0
    %1446 = vmatpush1.bf16.msra.mxu0 0
    %1447 = vmatprep.subr.bf16.mxu0 0
    %1448 = vmatpush1.bf16.msra.mxu0 0
    %1449 = vmatprep.subr.bf16.mxu0 0
    %1450 = vmatpush1.bf16.msra.mxu0 0
    %1451 = vmatprep.subr.bf16.mxu0 0
    %1452 = vmatpush1.bf16.msra.mxu0 0
    %1453 = vmatprep.subr.bf16.mxu0 0
    %1454 = vmatpush1.bf16.msra.mxu0 0
    %1455 = vmatprep.subr.bf16.mxu0 0
    %1456 = vmatpush1.bf16.msra.mxu0 0
    %1457 = vmatprep.subr.bf16.mxu0 0
    %1458 = vmatpush1.bf16.msra.mxu0 0
    %1459 = vmatprep.subr.bf16.mxu0 0
    %1460 = vmatpush1.bf16.msra.mxu0 0
    %1461 = vmatprep.subr.bf16.mxu0 0
    %1462 = vmatpush1.bf16.msra.mxu0 0
    %1463 = vmatprep.subr.bf16.mxu0 0
    %1464 = vmatpush1.bf16.msra.mxu0 0
    %1465 = vmatprep.subr.bf16.mxu0 0
    %1466 = vmatpush1.bf16.msra.mxu0 0
    %1467 = vmatprep.subr.bf16.mxu0 0
    %1468 = vmatpush1.bf16.msra.mxu0 0
    %1469 = vmatprep.subr.bf16.mxu0 0
    %1470 = vmatpush1.bf16.msra.mxu0 0
    %1471 = vmatprep.subr.bf16.mxu0 0
    %1472 = vmatpush1.bf16.msra.mxu0 0
    %1473 = vmatprep.mubr.bf16.mxu0 0
    %1474 = vmatmul.mubr.bf16.gmra.mrb[0].mxu0 %v1439
    %v1475 = vpop.f32.mrb[0].mxu0
    %v1476 = vadd.f32 0.0, %v1475
    %v1477 = vpop.f32.mrb[0].mxu0
    %v1478 = vpop.f32.mrb[0].mxu0
    %v1479 = vpop.f32.mrb[0].mxu0
    %1480 = vdwg.mxu0
    %1482 = vrot.lane.b32.xlu0 %v1434, 64
    %v1483 = vpop.permute.xlu0 %1482
    %v1485 = vsel %vm171, %v1483, 0
    %1487 = vmatprep.subr.bf16.mxu0 0
    %1488 = vmatpush1.bf16.msra.mxu0 %v300
    %1489 = vmatprep.subr.bf16.mxu0 0
    %1490 = vmatpush1.bf16.msra.mxu0 %v301
    %1491 = vmatprep.subr.bf16.mxu0 0
    %1492 = vmatpush1.bf16.msra.mxu0 0
    %1493 = vmatprep.subr.bf16.mxu0 0
    %1494 = vmatpush1.bf16.msra.mxu0 0
    %1495 = vmatprep.subr.bf16.mxu0 0
    %1496 = vmatpush1.bf16.msra.mxu0 0
    %1497 = vmatprep.subr.bf16.mxu0 0
    %1498 = vmatpush1.bf16.msra.mxu0 0
    %1499 = vmatprep.subr.bf16.mxu0 0
    %1500 = vmatpush1.bf16.msra.mxu0 0
    %1501 = vmatprep.subr.bf16.mxu0 0
    %1502 = vmatpush1.bf16.msra.mxu0 0
    %1503 = vmatprep.subr.bf16.mxu0 0
    %1504 = vmatpush1.bf16.msra.mxu0 0
    %1505 = vmatprep.subr.bf16.mxu0 0
    %1506 = vmatpush1.bf16.msra.mxu0 0
    %1507 = vmatprep.subr.bf16.mxu0 0
    %1508 = vmatpush1.bf16.msra.mxu0 0
    %1509 = vmatprep.subr.bf16.mxu0 0
    %1510 = vmatpush1.bf16.msra.mxu0 0
    %1511 = vmatprep.subr.bf16.mxu0 0
    %1512 = vmatpush1.bf16.msra.mxu0 0
    %1513 = vmatprep.subr.bf16.mxu0 0
    %1514 = vmatpush1.bf16.msra.mxu0 0
    %1515 = vmatprep.subr.bf16.mxu0 0
    %1516 = vmatpush1.bf16.msra.mxu0 0
    %1517 = vmatprep.subr.bf16.mxu0 0
    %1518 = vmatpush1.bf16.msra.mxu0 0
    %1519 = vmatprep.mubr.bf16.mxu0 0
    %1520 = vmatmul.mubr.bf16.gmra.mrb[0].mxu0 %v1485
    %v1521 = vpop.f32.mrb[0].mxu0
    %v1522 = vadd.f32 %v1476, %v1521
    %v1523 = vpop.f32.mrb[0].mxu0
    %v1524 = vpop.f32.mrb[0].mxu0
    %v1525 = vpop.f32.mrb[0].mxu0
    %1526 = vdwg.mxu0
    %v1527 = vadd.f32 %v1522, %v62
    %v1528 = vtanh.pop %v1527
    %v1529 = vmul.f32 %v1528, 0.5
    %v1530 = vadd.f32 %v1529, 0.5
    %v1531 = vmul.f32 %v1530, %v1347
    %1533 = vrot.lane.b32.xlu0 %v1528, 32
    %v1534 = vpop.permute.xlu0 %1533
    %v1536 = vmul.f32 %v1530, %v1534
    %1538 = vrot.lane.b32.xlu0 %v1536, 32
    %v1539 = vpop.permute.xlu0 %1538
    %v1541 = vadd.f32 %v1531, %v1539
    %v1542 = vtanh.pop %v1541
    %1544 = vrot.lane.b32.xlu0 %v1542, 32
    %v1545 = vpop.permute.xlu0 %1544
    %v1547 = vmul.f32 %v1530, %v1545
    %v1548 = vpack.c.bf16 %v1547, %v1547
    %v1549 = vmul.f32 %v1547, %v370
    %1551 = vrot.lane.b32.xlu0 %v1549, 64
    %v1552 = vpop.permute.xlu0 %1551
    %v1554 = vsel %vm377, %v1552, 0.0
    %1555 = vadd.xlane.f32.xlu0 %v1554
    %v1556 = vpop.xlane.xlu0 %1555
    %v1557 = vadd.f32 %v1556, %v75
    %v1558 = vmul.f32 %v1557, 0.5
    %v1559 = vtanh.pop %v1558
    %v1560 = vmul.f32 %v1559, 0.5
    %v1561 = vadd.f32 %v1560, 0.5
    %s1562 = scalar_lea.vmem %s7, 24
    %1563 = vst.msk [vmem:[%s1562] sm:$0xf] %vm386, %v1561
    %1564 = vmatprep.subr.bf16.mxu0 0
    %1565 = vmatpush1.bf16.msra.mxu0 %v167
    %1566 = vmatprep.subr.bf16.mxu0 0
    %1567 = vmatpush1.bf16.msra.mxu0 %v168
    %1568 = vmatprep.subr.bf16.mxu0 0
    %1569 = vmatpush1.bf16.msra.mxu0 0
    %1570 = vmatprep.subr.bf16.mxu0 0
    %1571 = vmatpush1.bf16.msra.mxu0 0
    %1572 = vmatprep.subr.bf16.mxu0 0
    %1573 = vmatpush1.bf16.msra.mxu0 0
    %1574 = vmatprep.subr.bf16.mxu0 0
    %1575 = vmatpush1.bf16.msra.mxu0 0
    %1576 = vmatprep.subr.bf16.mxu0 0
    %1577 = vmatpush1.bf16.msra.mxu0 0
    %1578 = vmatprep.subr.bf16.mxu0 0
    %1579 = vmatpush1.bf16.msra.mxu0 0
    %1580 = vmatprep.subr.bf16.mxu0 0
    %1581 = vmatpush1.bf16.msra.mxu0 0
    %1582 = vmatprep.subr.bf16.mxu0 0
    %1583 = vmatpush1.bf16.msra.mxu0 0
    %1584 = vmatprep.subr.bf16.mxu0 0
    %1585 = vmatpush1.bf16.msra.mxu0 0
    %1586 = vmatprep.subr.bf16.mxu0 0
    %1587 = vmatpush1.bf16.msra.mxu0 0
    %1588 = vmatprep.subr.bf16.mxu0 0
    %1589 = vmatpush1.bf16.msra.mxu0 0
    %1590 = vmatprep.subr.bf16.mxu0 0
    %1591 = vmatpush1.bf16.msra.mxu0 0
    %1592 = vmatprep.subr.bf16.mxu0 0
    %1593 = vmatpush1.bf16.msra.mxu0 0
    %1594 = vmatprep.subr.bf16.mxu0 0
    %1595 = vmatpush1.bf16.msra.mxu0 0
    %1596 = vmatprep.mubr.bf16.mxu0 0
    %1597 = vmatmul.mubr.bf16.gmra.mrb[0].mxu0 %v1485
    %v1598 = vpop.f32.mrb[0].mxu0
    %v1599 = vadd.f32 0.0, %v1598
    %v1600 = vpop.f32.mrb[0].mxu0
    %v1601 = vpop.f32.mrb[0].mxu0
    %v1602 = vpop.f32.mrb[0].mxu0
    %1603 = vdwg.mxu0
    %v1605 = vrot.slane %v1599, 4
    %v1607 = vadd.f32 %v156, %v1605
    %v1608 = vtanh.pop %v1607
    %v1609 = vmul.f32 %v1608, 0.5
    %v1610 = vadd.f32 %v1609, 0.5
    %v1612 = vrot.slane %v1427, 4
    %v1614 = vmul.f32 %v1610, %v1612
    %1616 = vrot.lane.b32.xlu0 %v1608, 32
    %v1617 = vpop.permute.xlu0 %1616
    %v1619 = vmul.f32 %v1610, %v1617
    %1621 = vrot.lane.b32.xlu0 %v1619, 32
    %v1622 = vpop.permute.xlu0 %1621
    %v1624 = vadd.f32 %v1614, %v1622
    %v1625 = vtanh.pop %v1624
    %1627 = vrot.lane.b32.xlu0 %v1625, 32
    %v1628 = vpop.permute.xlu0 %1627
    %v1630 = vmul.f32 %v1610, %v1628
    %v1631 = vpack.c.bf16 %v1630, %v1630
    %1633 = vrot.lane.b32.xlu0 %v1548, 64
    %v1634 = vpop.permute.xlu0 %1633
    %v1636 = vsel %vm171, %v1634, 0
    %1638 = vmatprep.subr.bf16.mxu0 0
    %1639 = vmatpush1.bf16.msra.mxu0 %v245
    %1640 = vmatprep.subr.bf16.mxu0 0
    %1641 = vmatpush1.bf16.msra.mxu0 %v246
    %1642 = vmatprep.subr.bf16.mxu0 0
    %1643 = vmatpush1.bf16.msra.mxu0 0
    %1644 = vmatprep.subr.bf16.mxu0 0
    %1645 = vmatpush1.bf16.msra.mxu0 0
    %1646 = vmatprep.subr.bf16.mxu0 0
    %1647 = vmatpush1.bf16.msra.mxu0 0
    %1648 = vmatprep.subr.bf16.mxu0 0
    %1649 = vmatpush1.bf16.msra.mxu0 0
    %1650 = vmatprep.subr.bf16.mxu0 0
    %1651 = vmatpush1.bf16.msra.mxu0 0
    %1652 = vmatprep.subr.bf16.mxu0 0
    %1653 = vmatpush1.bf16.msra.mxu0 0
    %1654 = vmatprep.subr.bf16.mxu0 0
    %1655 = vmatpush1.bf16.msra.mxu0 0
    %1656 = vmatprep.subr.bf16.mxu0 0
    %1657 = vmatpush1.bf16.msra.mxu0 0
    %1658 = vmatprep.subr.bf16.mxu0 0
    %1659 = vmatpush1.bf16.msra.mxu0 0
    %1660 = vmatprep.subr.bf16.mxu0 0
    %1661 = vmatpush1.bf16.msra.mxu0 0
    %1662 = vmatprep.subr.bf16.mxu0 0
    %1663 = vmatpush1.bf16.msra.mxu0 0
    %1664 = vmatprep.subr.bf16.mxu0 0
    %1665 = vmatpush1.bf16.msra.mxu0 0
    %1666 = vmatprep.subr.bf16.mxu0 0
    %1667 = vmatpush1.bf16.msra.mxu0 0
    %1668 = vmatprep.subr.bf16.mxu0 0
    %1669 = vmatpush1.bf16.msra.mxu0 0
    %1670 = vmatprep.mubr.bf16.mxu0 0
    %1671 = vmatmul.mubr.bf16.gmra.mrb[0].mxu0 %v1636
    %v1672 = vpop.f32.mrb[0].mxu0
    %v1673 = vadd.f32 0.0, %v1672
    %v1674 = vpop.f32.mrb[0].mxu0
    %v1675 = vpop.f32.mrb[0].mxu0
    %v1676 = vpop.f32.mrb[0].mxu0
    %1677 = vdwg.mxu0
    %v1679 = vrot.slane %v1631, 2
    %1680 = vrot.lane.b32.xlu0 %v1679, 64
    %v1681 = vpop.permute.xlu0 %1680
    %v1683 = vsel %vm171, %v1681, 0
    %1685 = vmatprep.subr.bf16.mxu0 0
    %1686 = vmatpush1.bf16.msra.mxu0 %v300
    %1687 = vmatprep.subr.bf16.mxu0 0
    %1688 = vmatpush1.bf16.msra.mxu0 %v301
    %1689 = vmatprep.subr.bf16.mxu0 0
    %1690 = vmatpush1.bf16.msra.mxu0 0
    %1691 = vmatprep.subr.bf16.mxu0 0
    %1692 = vmatpush1.bf16.msra.mxu0 0
    %1693 = vmatprep.subr.bf16.mxu0 0
    %1694 = vmatpush1.bf16.msra.mxu0 0
    %1695 = vmatprep.subr.bf16.mxu0 0
    %1696 = vmatpush1.bf16.msra.mxu0 0
    %1697 = vmatprep.subr.bf16.mxu0 0
    %1698 = vmatpush1.bf16.msra.mxu0 0
    %1699 = vmatprep.subr.bf16.mxu0 0
    %1700 = vmatpush1.bf16.msra.mxu0 0
    %1701 = vmatprep.subr.bf16.mxu0 0
    %1702 = vmatpush1.bf16.msra.mxu0 0
    %1703 = vmatprep.subr.bf16.mxu0 0
    %1704 = vmatpush1.bf16.msra.mxu0 0
    %1705 = vmatprep.subr.bf16.mxu0 0
    %1706 = vmatpush1.bf16.msra.mxu0 0
    %1707 = vmatprep.subr.bf16.mxu0 0
    %1708 = vmatpush1.bf16.msra.mxu0 0
    %1709 = vmatprep.subr.bf16.mxu0 0
    %1710 = vmatpush1.bf16.msra.mxu0 0
    %1711 = vmatprep.subr.bf16.mxu0 0
    %1712 = vmatpush1.bf16.msra.mxu0 0
    %1713 = vmatprep.subr.bf16.mxu0 0
    %1714 = vmatpush1.bf16.msra.mxu0 0
    %1715 = vmatprep.subr.bf16.mxu0 0
    %1716 = vmatpush1.bf16.msra.mxu0 0
    %1717 = vmatprep.mubr.bf16.mxu0 0
    %1718 = vmatmul.mubr.bf16.gmra.mrb[0].mxu0 %v1683
    %v1719 = vpop.f32.mrb[0].mxu0
    %v1720 = vadd.f32 %v1673, %v1719
    %v1721 = vpop.f32.mrb[0].mxu0
    %v1722 = vpop.f32.mrb[0].mxu0
    %v1723 = vpop.f32.mrb[0].mxu0
    %1724 = vdwg.mxu0
    %v1725 = vadd.f32 %v1720, %v62
    %v1726 = vtanh.pop %v1725
    %v1727 = vmul.f32 %v1726, 0.5
    %v1728 = vadd.f32 %v1727, 0.5
    %v1729 = vmul.f32 %v1728, %v1541
    %1731 = vrot.lane.b32.xlu0 %v1726, 32
    %v1732 = vpop.permute.xlu0 %1731
    %v1734 = vmul.f32 %v1728, %v1732
    %1736 = vrot.lane.b32.xlu0 %v1734, 32
    %v1737 = vpop.permute.xlu0 %1736
    %v1739 = vadd.f32 %v1729, %v1737
    %v1740 = vtanh.pop %v1739
    %1742 = vrot.lane.b32.xlu0 %v1740, 32
    %v1743 = vpop.permute.xlu0 %1742
    %v1745 = vmul.f32 %v1728, %v1743
    %v1746 = vmul.f32 %v1745, %v370
    %1748 = vrot.lane.b32.xlu0 %v1746, 64
    %v1749 = vpop.permute.xlu0 %1748
    %v1751 = vsel %vm377, %v1749, 0.0
    %1752 = vadd.xlane.f32.xlu0 %v1751
    %v1753 = vpop.xlane.xlu0 %1752
    %v1754 = vadd.f32 %v1753, %v75
    %v1755 = vmul.f32 %v1754, 0.5
    %v1756 = vtanh.pop %v1755
    %v1757 = vmul.f32 %v1756, 0.5
    %v1758 = vadd.f32 %v1757, 0.5
    %s1759 = scalar_lea.vmem %s7, 28
    %1760 = vst.msk [vmem:[%s1759] sm:$0xf] %vm386, %v1758
    // Predicated region
    $region34: #{tpu_custom_call.1} parent=1 // pred_check
      _
    $region35: #{tpu_custom_call.1} parent=1 // pred_check_branch
      %1762 = sbr.rel (0) target = $region37
    $region36: #{tpu_custom_call.1} parent=1 // pred_region
      _
    $region37: #{tpu_custom_call.1} parent=1 // pred_fallthru
      _
    // Predicated region
    $region38: #{tpu_custom_call.1} parent=1 // pred_check
      _
    $region39: #{tpu_custom_call.1} parent=1 // pred_check_branch
      %1764 = sbr.rel (0) target = $region41
    $region40: #{tpu_custom_call.1} parent=1 // pred_region
      _
    $region41: #{tpu_custom_call.1} parent=1 // pred_fallthru
      _
    %1765 = vsyncpa [#allocation4], 1

</llo_original>
